<compile_context>
chip_gen: v5e
topology: v5e:2x2
jax: 0.10.0
libtpu: 0.0.40
codegen_flags: <defaults>
</compile_context>

<pallas_src>
import functools

import jax
import jax.numpy as jnp
import numpy as np
from jax import lax
from jax.experimental import pallas as pl
from jax.experimental.pallas import tpu as pltpu


def _round_up(x, m):
    return ((x + m - 1) // m) * m


def _largest_divisor_leq(n, cap):
    for d in range(min(cap, n), 0, -1):
        if n % d == 0:
            return d
    return 1


# ----------------------------------------------------------------------------
# Phase 1: non-recurrent x-path conv + bias as ONE tall matmul per batch block.
# slab (im2col'ed in the wrapper): (B*T*H*W, KH*KW*CIN)  bf16
# grid=(B,), "parallel" -> both v7x TensorCores get work; tiny fixed overhead.
# ----------------------------------------------------------------------------
def _xgates_kernel(slab_ref, wx_ref, b_ref, xg_ref):
    acc = jnp.dot(slab_ref[...], wx_ref[...],
                  preferred_element_type=jnp.float32)        # (T*M, 4*CH) f32
    xg_ref[0] = (acc + b_ref[...]).astype(xg_ref.dtype)      # bias folded, bf16


# ----------------------------------------------------------------------------
# Phase 2: serial recurrence.  grid=(B, nchunks), ("parallel", "arbitrary").
# Each grid step runs TB timesteps (unrolled) for one batch element.  The
# hidden state lives in a zero-padded VMEM scratch so no per-step jnp.pad; the
# KH*KW h-path taps are fused into a single K = KH*KW*CH bf16 matmul per step.
# ----------------------------------------------------------------------------
def _recurrent_kernel(
    xg_ref,      # (1, TB*MB, 4*CH) bf16   precomputed x-path + bias
    wh_ref,      # (KH*KW*CH, 4*CH) bf16
    wci_ref,     # (MB, CH) f32            peephole i
    wcf_ref,     # (MB, CH) f32            peephole f
    wco_ref,     # (MB, CH) f32            peephole o
    h0p_ref,     # (1, Hp, Wpad, CH) f32   initial h, already zero-padded
    c0_ref,      # (1, MB, CH) f32         initial c
    hseq_ref,    # out: (1, TB*H, W*CH) f32  lane-dense
    clast_ref,   # out: (1, H, W*CH) f32     lane-dense, written once
    hp_st,       # scratch VMEM (Hp, Wpad, CH) f32  padded hidden state
    c_st,        # scratch VMEM (MB, CH) f32        cell state
    *,
    H, W, CH, KH, KW, PWL, TB,
):
    n = pl.program_id(1)
    ph = (KH - 1) // 2
    pw = (KW - 1) // 2
    base = PWL - pw                       # W-offset of the conv window start
    MB = H * W

    @pl.when(n == 0)
    def _init():
        hp_st[...] = h0p_ref[0]           # borders are zero, interior = h0
        c_st[...] = c0_ref[0]

    # Unrolled loop over the TB timesteps of this chunk (static trip count).
    for t in range(TB):
        # ---- fused h-path conv as a single matmul ----------------------------
        hp = hp_st[...]                   # (Hp, Wpad, CH)
        taps = []
        for ki in range(KH):
            for kj in range(KW):
                cstart = base + kj
                taps.append(hp[ki:ki + H, cstart:cstart + W, :].reshape(MB, CH))
        slab = jnp.concatenate(taps, axis=-1).astype(jnp.bfloat16)   # (MB, K*CH)

        acc = (xg_ref[0, t * MB:(t + 1) * MB, :].astype(jnp.float32)
               + jnp.dot(slab, wh_ref[...],
                         preferred_element_type=jnp.float32))        # (MB, 4CH)

        # ---- gate math (f32), torch.split order: i, f, o, g ------------------
        c = c_st[...]
        cc_i = acc[:, 0 * CH:1 * CH]
        cc_f = acc[:, 1 * CH:2 * CH]
        cc_o = acc[:, 2 * CH:3 * CH]
        cc_g = acc[:, 3 * CH:4 * CH]

        i_g = jax.nn.sigmoid(cc_i + wci_ref[...] * c)
        f_g = jax.nn.sigmoid(cc_f + wcf_ref[...] * c)
        g_g = jnp.tanh(cc_g)
        c_next = f_g * c + i_g * g_g
        o_g = jax.nn.sigmoid(cc_o + wco_ref[...] * c_next)
        h_next = o_g * jnp.tanh(c_next)

        # ---- state update + lane-dense output stores --------------------------
        c_st[...] = c_next
        hp_st[ph:ph + H, PWL:PWL + W, :] = h_next.reshape(H, W, CH)
        hseq_ref[0, t * H:(t + 1) * H, :] = h_next.reshape(H, W * CH)

    @pl.when(n == pl.num_programs(1) - 1)
    def _fin():
        clast_ref[0] = c_st[...].reshape(H, W * CH)


# ----------------------------------------------------------------------------
# Wrapper: PyTorch-layout in / PyTorch-layout out.
# ----------------------------------------------------------------------------
def conv_lstm_pallas(x, weight, bias, wci, wcf, wco, h0=None, c0=None):
    """ConvLSTM forward.

    x:      (B, T, CIN, H, W)  float32   (PyTorch NCHW-per-step convention)
    weight: (4*CH, CIN+CH, KH, KW)       (PyTorch Conv2d OIHW)
    bias:   (4*CH,)
    wci/wcf/wco: (1, CH, H, W)           (peephole params)
    Returns (h_seq (B,T,CH,H,W), h_last (B,CH,H,W), c_last (B,CH,H,W)).
    """
    B, T, CIN, H, W = x.shape
    CH = wci.shape[1]
    KH, KW = weight.shape[2], weight.shape[3]
    ph, pw = (KH - 1) // 2, (KW - 1) // 2
    Hp, Wp = H + 2 * ph, W + 2 * pw               # padded x dims
    PWL = _round_up(pw, 8)                        # tile-aligned interior offset
    Wpad = PWL + W + pw                           # padded h-scratch W dim
    MB = H * W                                    # rows per (batch, timestep)
    TMB = T * MB

    # Timesteps unrolled per grid step (knob: keeps working set / code size
    # bounded for long sequences; TB == T at small T).
    TB = _largest_divisor_leq(T, 8)
    nchunks = T // TB

    # ---- one-time layout prep (outside the serial loop) ----------------------
    x_k = jnp.transpose(x, (0, 1, 3, 4, 2)).astype(jnp.float32)   # (B,T,H,W,CIN)
    x_pad = jnp.pad(x_k, ((0, 0), (0, 0), (ph, ph), (pw, pw), (0, 0)))
    xtaps = []
    for ki in range(KH):
        for kj in range(KW):
            xtaps.append(
                x_pad[:, :, ki:ki + H, kj:kj + W, :].reshape(B * TMB, CIN))
    slab_x = jnp.concatenate(xtaps, axis=-1).astype(jnp.bfloat16)  # (B*T*M, Kx)

    w_t = jnp.transpose(weight, (2, 3, 1, 0)).astype(jnp.float32)  # (KH,KW,C,4CH)
    wx = w_t[:, :, :CIN, :].reshape(KH * KW * CIN, 4 * CH).astype(jnp.bfloat16)
    wh = w_t[:, :, CIN:, :].reshape(KH * KW * CH, 4 * CH).astype(jnp.bfloat16)
    b2 = bias.reshape(1, 4 * CH).astype(jnp.float32)

    def _peep(p):                                  # (1,CH,H,W) -> (MB, CH)
        return jnp.transpose(p[0], (1, 2, 0)).astype(jnp.float32).reshape(MB, CH)
    wci_k, wcf_k, wco_k = _peep(wci), _peep(wcf), _peep(wco)

    if h0 is None:
        h0p = jnp.zeros((B, Hp, Wpad, CH), jnp.float32)
    else:
        h0_k = jnp.transpose(h0, (0, 2, 3, 1)).astype(jnp.float32)
        h0p = jnp.pad(h0_k, ((0, 0), (ph, ph), (PWL, Wpad - PWL - W), (0, 0)))
    if c0 is None:
        c0_k = jnp.zeros((B, MB, CH), jnp.float32)
    else:
        c0_k = jnp.transpose(c0, (0, 2, 3, 1)).astype(jnp.float32).reshape(B, MB, CH)

    # ---- phase 1: x-path conv + bias, one tall matmul per batch block --------
    xg = pl.pallas_call(
        _xgates_kernel,
        out_shape=jax.ShapeDtypeStruct((B, TMB, 4 * CH), jnp.bfloat16),
        grid_spec=pltpu.PrefetchScalarGridSpec(
            num_scalar_prefetch=0,
            grid=(B,),
            in_specs=[
                pl.BlockSpec((TMB, KH * KW * CIN), lambda b: (b, 0)),
                pl.BlockSpec((KH * KW * CIN, 4 * CH), lambda b: (0, 0)),
                pl.BlockSpec((1, 4 * CH), lambda b: (0, 0)),
            ],
            out_specs=pl.BlockSpec((1, TMB, 4 * CH), lambda b: (b, 0, 0)),
        ),
        compiler_params=pltpu.CompilerParams(
            dimension_semantics=("parallel",)),
    )(slab_x, wx, b2)

    # ---- phase 2: recurrence, batch-parallel grid, unrolled T-chunks ----------
    kernel = functools.partial(_recurrent_kernel,
                               H=H, W=W, CH=CH, KH=KH, KW=KW, PWL=PWL, TB=TB)
    hseq, clast = pl.pallas_call(
        kernel,
        out_shape=(
            jax.ShapeDtypeStruct((B, T * H, W * CH), jnp.float32),
            jax.ShapeDtypeStruct((B, H, W * CH), jnp.float32),
        ),
        grid_spec=pltpu.PrefetchScalarGridSpec(
            num_scalar_prefetch=0,
            grid=(B, nchunks),
            in_specs=[
                pl.BlockSpec((1, TB * MB, 4 * CH), lambda b, n: (b, n, 0)),
                pl.BlockSpec((KH * KW * CH, 4 * CH), lambda b, n: (0, 0)),
                pl.BlockSpec((MB, CH), lambda b, n: (0, 0)),
                pl.BlockSpec((MB, CH), lambda b, n: (0, 0)),
                pl.BlockSpec((MB, CH), lambda b, n: (0, 0)),
                pl.BlockSpec((1, Hp, Wpad, CH), lambda b, n: (b, 0, 0, 0)),
                pl.BlockSpec((1, MB, CH), lambda b, n: (b, 0, 0)),
            ],
            out_specs=[
                pl.BlockSpec((1, TB * H, W * CH), lambda b, n: (b, n, 0)),
                pl.BlockSpec((1, H, W * CH), lambda b, n: (b, 0, 0)),
            ],
            scratch_shapes=[
                pltpu.VMEM((Hp, Wpad, CH), jnp.float32),   # padded h state
                pltpu.VMEM((MB, CH), jnp.float32),         # c state
            ],
        ),
        compiler_params=pltpu.CompilerParams(
            dimension_semantics=("parallel", "arbitrary")),
    )(xg, wh, wci_k, wcf_k, wco_k, h0p, c0_k)

    # ---- back to the PyTorch output convention (single transpose pass) -------
    h_seq = jnp.transpose(hseq.reshape(B, T, H, W, CH), (0, 1, 4, 2, 3))
    h_last = h_seq[:, -1]
    c_last = jnp.transpose(clast.reshape(B, H, W, CH), (0, 3, 1, 2))
    return h_seq, h_last, c_last


# ----------------------------------------------------------------------------
# Pure-JAX reference (matches the PyTorch module semantics) for validation.
# ----------------------------------------------------------------------------
def conv_lstm_ref(x, weight, bias, wci, wcf, wco):
    B, T, CIN, H, W = x.shape
    KH, KW = weight.shape[2], weight.shape[3]
    ph, pw = (KH - 1) // 2, (KW - 1) // 2
    CH = wci.shape[1]
    h = jnp.zeros((B, CH, H, W), jnp.float32)
    c = jnp.zeros((B, CH, H, W), jnp.float32)
    outs = []
    for t in range(T):
        comb = jnp.concatenate([x[:, t], h], axis=1)
        cc = lax.conv_general_dilated(
            comb, weight, window_strides=(1, 1),
            padding=[(ph, ph), (pw, pw)],
            dimension_numbers=("NCHW", "OIHW", "NCHW"))
        cc = cc + bias[None, :, None, None]
        cc_i, cc_f, cc_o, cc_g = jnp.split(cc, 4, axis=1)
        i_g = jax.nn.sigmoid(cc_i + wci * c)
        f_g = jax.nn.sigmoid(cc_f + wcf * c)
        g_g = jnp.tanh(cc_g)
        c = f_g * c + i_g * g_g
        o_g = jax.nn.sigmoid(cc_o + wco * c)
        h = o_g * jnp.tanh(c)
        outs.append(h)
    return jnp.stack(outs, 1), h, c


# ----------------------------------------------------------------------------
# Deterministic parameter init (mirrors the PyTorch __init__):
#   Conv2d weight: xavier_normal_,  bias: uniform_(0,1),  peepholes: zeros.
# ----------------------------------------------------------------------------
def init_params(key, in_channels, hidden_channels, kernel_size, H, W):
    kh, kw = kernel_size
    ctot = in_channels + hidden_channels
    cout = 4 * hidden_channels
    fan_in = ctot * kh * kw
    fan_out = cout * kh * kw
    std = float(np.sqrt(2.0 / (fan_in + fan_out)))
    k_w, k_b = jax.random.split(key)
    weight = std * jax.random.normal(k_w, (cout, ctot, kh, kw), jnp.float32)
    bias = jax.random.uniform(k_b, (cout,), jnp.float32)
    wci = jnp.zeros((1, hidden_channels, H, W), jnp.float32)
    wcf = jnp.zeros((1, hidden_channels, H, W), jnp.float32)
    wco = jnp.zeros((1, hidden_channels, H, W), jnp.float32)
    return weight, bias, wci, wcf, wco


if __name__ == "__main__":
    # Small shapes consistent with ConvLSTM.forward: x is (B, seq, C, H, W).
    B, T, CIN, H, W = 2, 8, 4, 16, 16
    CH = 32
    KSIZE = (3, 3)

    key = jax.random.PRNGKey(0)
    k_x, k_p = jax.random.split(key)
    x = jax.random.normal(k_x, (B, T, CIN, H, W), jnp.float32)
    weight, bias, wci, wcf, wco = init_params(k_p, CIN, CH, KSIZE, H, W)

    h_seq, h_last, c_last = conv_lstm_pallas(x, weight, bias, wci, wcf, wco)
    jax.block_until_ready((h_seq, h_last, c_last))

    # Validate against the pure-JAX f32 reference.  Matmul operands AND the
    # stored x-path pre-activations are bf16 -> slightly relaxed tolerances.
    h_seq_r, h_last_r, c_last_r = conv_lstm_ref(x, weight, bias, wci, wcf, wco)
    np.testing.assert_allclose(np.asarray(h_seq), np.asarray(h_seq_r),
                               rtol=4e-2, atol=4e-2)
    np.testing.assert_allclose(np.asarray(h_last), np.asarray(h_last_r),
                               rtol=4e-2, atol=4e-2)
    np.testing.assert_allclose(np.asarray(c_last), np.asarray(c_last_r),
                               rtol=4e-2, atol=4e-2)

    assert h_seq.shape == (B, T, CH, H, W)
    assert h_last.shape == (B, CH, H, W)
    assert c_last.shape == (B, CH, H, W)
    print("KERNEL_OK")
</pallas_src>

<mosaic_0001>
module attributes {stable_mosaic.version = 11 : i64} {
  func.func @_xgates_kernel(%arg0: i32, %arg1: memref<2048x36xbf16, #tpu.memory_space<vmem>>, %arg2: memref<36x128xbf16, #tpu.memory_space<vmem>>, %arg3: memref<1x128xf32, #tpu.memory_space<vmem>>, %arg4: memref<1x2048x128xbf16, #tpu.memory_space<vmem>>) attributes {dimension_semantics = [#tpu.dimension_semantics<parallel>], iteration_bounds = array<i64: 2>, scalar_prefetch = 0 : i64, scratch_operands = 0 : i64, tpu.core_type = #tpu.core_type<tc>, window_params = [{transform_indices = @transform_0, window_bounds = array<i64: 2048, 36>}, {pipeline_mode = #tpu.pipeline_mode<synchronous>, transform_indices = @transform_1, window_bounds = array<i64: 36, 128>}, {pipeline_mode = #tpu.pipeline_mode<synchronous>, transform_indices = @transform_2, window_bounds = array<i64: 1, 128>}, {transform_indices = @transform_3, window_bounds = array<i64: 1, 2048, 128>}]} {
    %c0 = arith.constant 0 : index
    %c0_0 = arith.constant 0 : index
    %0 = vector.load %arg1[%c0, %c0_0] : memref<2048x36xbf16, #tpu.memory_space<vmem>>, vector<2048x36xbf16>
    %c0_1 = arith.constant 0 : index
    %c0_2 = arith.constant 0 : index
    %1 = vector.load %arg2[%c0_1, %c0_2] : memref<36x128xbf16, #tpu.memory_space<vmem>>, vector<36x128xbf16>
    %cst = arith.constant dense<0.000000e+00> : vector<2048x128xf32>
    %2 = tpu.matmul %0, %1, %cst {dimension_numbers = #tpu.dot_dimension_numbers<[1], [0], [0], [1], [0, 0, 1, 1], [], []>} : vector<2048x36xbf16>, vector<36x128xbf16>, vector<2048x128xf32> -> vector<2048x128xf32>
    %c0_3 = arith.constant 0 : index
    %c0_4 = arith.constant 0 : index
    %3 = vector.load %arg3[%c0_3, %c0_4] : memref<1x128xf32, #tpu.memory_space<vmem>>, vector<1x128xf32>
    %4 = vector.broadcast %3 : vector<1x128xf32> to vector<2048x128xf32>
    %5 = arith.addf %2, %4 : vector<2048x128xf32>
    %6 = arith.truncf %5 : vector<2048x128xf32> to vector<2048x128xbf16>
    %c0_5 = arith.constant 0 : index
    %c0_6 = arith.constant 0 : index
    %c0_7 = arith.constant 0 : index
    %7 = vector.load %arg4[%c0_5, %c0_6, %c0_7] : memref<1x2048x128xbf16, #tpu.memory_space<vmem>>, vector<1x2048x128xbf16>
    %8 = vector.shape_cast %7 : vector<1x2048x128xbf16> to vector<2048x128xbf16>
    %9 = vector.shape_cast %6 : vector<2048x128xbf16> to vector<1x2048x128xbf16>
    tpu.vector_store %arg4[%c0_5, %c0_6, %c0_7], %9 {strides = array<i32>} : memref<1x2048x128xbf16, #tpu.memory_space<vmem>>, vector<1x2048x128xbf16>,
    return
  }
  func.func @transform_0(%arg0: i32) -> (i32, i32) {
    %c0_i32 = arith.constant 0 : i32
    %c0_i32_0 = arith.constant 0 : i32
    return %arg0, %c0_i32 : i32, i32
  }
  func.func @transform_1(%arg0: i32) -> (i32, i32) {
    %c0_i32 = arith.constant 0 : i32
    %c0_i32_0 = arith.constant 0 : i32
    %c0_i32_1 = arith.constant 0 : i32
    return %c0_i32, %c0_i32_0 : i32, i32
  }
  func.func @transform_2(%arg0: i32) -> (i32, i32) {
    %c0_i32 = arith.constant 0 : i32
    %c0_i32_0 = arith.constant 0 : i32
    %c0_i32_1 = arith.constant 0 : i32
    return %c0_i32, %c0_i32_0 : i32, i32
  }
  func.func @transform_3(%arg0: i32) -> (i32, i32, i32) {
    %c0_i32 = arith.constant 0 : i32
    %c0_i32_0 = arith.constant 0 : i32
    %c0_i32_1 = arith.constant 0 : i32
    return %arg0, %c0_i32, %c0_i32_0 : i32, i32, i32
  }
}

</mosaic_0001>

<llo_original>
// kernel: tpu_custom_call.1
$region0: #{tpu_custom_call.1}
  #allocation0 [shape = 'u32[]', space=smem, size = 0x4, offset = 0x4, fixed_abs, tag = 'smem constant byte address 0x4 - core index']
  #allocation1 [shape = 'u32[72,128]{1,0:T(1,128)}', space=vmem, size = 0x9000, scoped, tag = 'internal scratch']
  %s0 = inlined_call_operand.vmem [shape: bf16[4096,36], index: 0, kind: input, shape index: {}]
  %s1 = inlined_call_operand.vmem [shape: bf16[36,128], index: 1, kind: input, shape index: {}]
  %s2 = inlined_call_operand.vmem [shape: f32[1,128], index: 2, kind: input, shape index: {}]
  %s3 = inlined_call_operand.hbm [shape: bf16[2,2048,128], index: 3, kind: output, shape index: {}]
  %s4 = sld [smem:[#allocation0]]
  $region45: #{tpu_custom_call.1} parent=0
    _
  %s6 = ssub.s32 1, %s4
  %s7 = scalar_select 0, %s6, %s4
  $region1: #{tpu_custom_call.1} parent=0
    #allocation2 [shape = 'u8[1048576]{0}', space=vmem, size = 0x100000, scoped, tag = 'output window, operand 0']
    #allocation3 [shape = 's32[2]{0}', space=sflag, size = 0x8, scoped, tag = 'scoped memory for tpu_custom_call.1']
    %8 = vsyncpa [#allocation3], 0
    %s9 = scalar_lea.sflag [#allocation3], 1
    %10 = vsyncpa %s9, 0
    loop: start=0, step=1, limit=4
    $region2: #{tpu_custom_call.1} parent=1 // loop_pre_header
      _
    $region3: #{tpu_custom_call.1} parent=1 // loop_header
      %s12 = sphi 0, %s16
      %p13 = scmp.ge.s32.totalorder %s12, 4
      %s22 = sphi 0, %s24
      %s25 = sphi 0, %s22
      %s26 = sphi 0, %s25
      %s42 = sphi 0, %s26
      %s46 = sphi 0, %s46
      %s48 = sphi 0, %s46
      %s49 = sphi 0, %s48
      %s63 = sphi 0, %s49
      %s67 = sphi 0, %s67
      %s69 = sphi 0, %s67
      %s70 = sphi 0, %s69
      %s84 = sphi 0, %s70
      %s90 = sphi 0, %s92
      %s93 = sphi 0, %s90
      %s94 = sphi 0, %s93
      %s110 = sphi 0, %s94
    $region4: #{tpu_custom_call.1} parent=1 // loop_header_branch
      %15 = sbr.rel (%p13) target = $region8
    $region5: #{tpu_custom_call.1} parent=1 // loop_body
      %s17 = ssub.s32 %s12, 1
      %s18 = ssub.s32 %s12, 2
      %s19 = sadd.s32 %s12, 1
      %s20 = ssub.s32 %s12, %s19
      %p21 = scmp.eq.s32.totalorder %s20, 0
      %s23 = sadd.s32 %s22, 1
      %s24 = scalar_select %p21, %s22, %s23
      %p27 = pneg %p21
      %p28 = scmp.eq.s32.totalorder %s12, 1
      %p29 = por %p27, %p28
      %p30 = scmp.ne.s32.totalorder %s22, %s25
      %p31 = scmp.eq.s32.totalorder %s12, 0
      %p32 = por %p30, %p31
      %p33 = scmp.ne.s32.totalorder %s22, %s25
      %p34 = scmp.eq.s32.totalorder %s17, 1
      %p35 = por %p33, %p34
      %p36 = scmp.ne.s32.totalorder %s25, %s26
      %p37 = scmp.eq.s32.totalorder %s17, 0
      %p38 = por %p36, %p37
      %p39 = scmp.ne.s32.totalorder %s25, %s26
      %p40 = scmp.eq.s32.totalorder %s18, 1
      %p41 = por %p39, %p40
      %p43 = scmp.ne.s32.totalorder %s26, %s42
      %p44 = scmp.eq.s32.totalorder %s18, 0
      %p45 = por %p43, %p44
      %s47 = sadd.s32 %s46, 1
      %p50 = scmp.eq.s32.totalorder %s12, 1
      %p51 = scmp.ne.s32.totalorder %s46, %s48
      %p52 = scmp.eq.s32.totalorder %s12, 0
      %p53 = por %p51, %p52
      %p54 = scmp.ne.s32.totalorder %s46, %s48
      %p55 = scmp.eq.s32.totalorder %s17, 1
      %p56 = por %p54, %p55
      %p57 = scmp.ne.s32.totalorder %s48, %s49
      %p58 = scmp.eq.s32.totalorder %s17, 0
      %p59 = por %p57, %p58
      %p60 = scmp.ne.s32.totalorder %s48, %s49
      %p61 = scmp.eq.s32.totalorder %s18, 1
      %p62 = por %p60, %p61
      %p64 = scmp.ne.s32.totalorder %s49, %s63
      %p65 = scmp.eq.s32.totalorder %s18, 0
      %p66 = por %p64, %p65
      %s68 = sadd.s32 %s67, 1
      %p71 = scmp.eq.s32.totalorder %s12, 1
      %p72 = scmp.ne.s32.totalorder %s67, %s69
      %p73 = scmp.eq.s32.totalorder %s12, 0
      %p74 = por %p72, %p73
      %p75 = scmp.ne.s32.totalorder %s67, %s69
      %p76 = scmp.eq.s32.totalorder %s17, 1
      %p77 = por %p75, %p76
      %p78 = scmp.ne.s32.totalorder %s69, %s70
      %p79 = scmp.eq.s32.totalorder %s17, 0
      %p80 = por %p78, %p79
      %p81 = scmp.ne.s32.totalorder %s69, %s70
      %p82 = scmp.eq.s32.totalorder %s18, 1
      %p83 = por %p81, %p82
      %p85 = scmp.ne.s32.totalorder %s70, %s84
      %p86 = scmp.eq.s32.totalorder %s18, 0
      %p87 = por %p85, %p86
      %s88 = ssub.s32 %s12, %s19
      %p89 = scmp.eq.s32.totalorder %s88, 0
      %s91 = sadd.s32 %s90, 1
      %s92 = scalar_select %p89, %s90, %s91
      %p95 = pneg %p89
      %p96 = scmp.eq.s32.totalorder %s12, 1
      %p97 = por %p95, %p96
      %p98 = scmp.ne.s32.totalorder %s90, %s93
      %p99 = scmp.eq.s32.totalorder %s12, 0
      %p100 = por %p98, %p99
      %p101 = scmp.ne.s32.totalorder %s90, %s93
      %p102 = scmp.eq.s32.totalorder %s17, 1
      %p103 = por %p101, %p102
      %p104 = scmp.ne.s32.totalorder %s93, %s94
      %p105 = scmp.eq.s32.totalorder %s17, 0
      %p106 = por %p104, %p105
      %p107 = scmp.ne.s32.totalorder %s93, %s94
      %p108 = scmp.eq.s32.totalorder %s18, 1
      %p109 = por %p107, %p108
      %p111 = scmp.ne.s32.totalorder %s94, %s110
      %p112 = scmp.eq.s32.totalorder %s18, 0
      %p113 = por %p111, %p112
      %p114 = scmp.le.s32.totalorder 1, %s12
      %p115 = scmp.lt.s32.totalorder %s12, 3
      %p116 = pnand %p114, %p115
      %p117 = pneg %p116
      // Predicated region
      $region9: #{tpu_custom_call.1} parent=5 // pred_check
        _
      $region10: #{tpu_custom_call.1} parent=5 // pred_check_branch
        %119 = sbr.rel (%p116) target = $region12
      $region11: #{tpu_custom_call.1} parent=5 // pred_region
        %s120 = ssub.s32 %s12, 1
        // Predicated region
        $region13: #{tpu_custom_call.1} parent=11 // pred_check
          %p121 = pneg %p59
        $region14: #{tpu_custom_call.1} parent=11 // pred_check_branch
          %123 = sbr.rel (%p121) target = $region16
        $region15: #{tpu_custom_call.1} parent=11 // pred_region
          _
        $region16: #{tpu_custom_call.1} parent=11 // pred_fallthru
          _
        // Predicated region
        $region17: #{tpu_custom_call.1} parent=11 // pred_check
          %p124 = pneg %p80
        $region18: #{tpu_custom_call.1} parent=11 // pred_check_branch
          %126 = sbr.rel (%p124) target = $region20
        $region19: #{tpu_custom_call.1} parent=11 // pred_region
          _
        $region20: #{tpu_custom_call.1} parent=11 // pred_fallthru
          _
      $region12: #{tpu_custom_call.1} parent=5 // pred_fallthru
        _
      %p127 = scmp.lt.s32.totalorder %s12, 2
      // Predicated region
      $region21: #{tpu_custom_call.1} parent=5 // pred_check
        %p128 = pneg %p127
      $region22: #{tpu_custom_call.1} parent=5 // pred_check_branch
        %130 = sbr.rel (%p128) target = $region24
      $region23: #{tpu_custom_call.1} parent=5 // pred_region
        // Predicated region
        $region25: #{tpu_custom_call.1} parent=23 // pred_check
          %p131 = pneg %p32
        $region26: #{tpu_custom_call.1} parent=23 // pred_check_branch
          %133 = sbr.rel (%p131) target = $region28
        $region27: #{tpu_custom_call.1} parent=23 // pred_region
          %s134 = smul.u32 256, %s12
          %p135 = scmp.lt.s32.totalorder %s134, 511
          %s136 = scalar_select %p135, %s134, 511
          %s137 = smul.addr %s136, 4
          %s138 = scalar_lea.vmem %s0, %s137
          %s139 = smul.u32 256, %s12
        $region28: #{tpu_custom_call.1} parent=23 // pred_fallthru
          _
      $region24: #{tpu_custom_call.1} parent=5 // pred_fallthru
        _
      %p140 = scmp.le.s32.totalorder 1, %s12
      %p141 = scmp.lt.s32.totalorder %s12, 3
      %p142 = pnand %p140, %p141
      %p143 = pneg %p142
      // Predicated region
      $region29: #{tpu_custom_call.1} parent=5 // pred_check
        _
      $region30: #{tpu_custom_call.1} parent=5 // pred_check_branch
        %145 = sbr.rel (%p142) target = $region32
      $region31: #{tpu_custom_call.1} parent=5 // pred_region
        %s146 = ssub.s32 %s12, 1
        %s147 = smul.u32 256, %s17
        %p148 = scmp.lt.s32.totalorder %s147, 511
        %s149 = scalar_select %p148, %s147, 511
        %s150 = smul.addr %s149, 4
        %s151 = scalar_lea.vmem %s0, %s150
        %p152 = pneg %p38
        %p153 = pneg %p35
        %p154 = pneg %p59
        %p155 = pneg %p56
        %p156 = pneg %p80
        %p157 = pneg %p77
        %p158 = pneg %p106
        %p159 = pneg %p103
        %s160 = sand.u32 %s93, 1
        %s161 = scalar_lea.sflag [#allocation3], %s160
        %s162 = sand.u32 %s93, 1
        %s163 = smul.addr %s162, 1024
        %s164 = scalar_lea.vmem [#allocation2], %s163
        %s165 = smul.u32 256, %s17
        %p166 = scmp.lt.s32.totalorder %s165, 511
        %s167 = scalar_select %p166, %s165, 511
        %s168 = smul.addr %s167, 4
        %s169 = scalar_lea.vmem %s0, %s168
        %s170 = smul.u32 256, %s17
        %v172 = vld [vmem:[%s169] sm:$0xf]
        %v173 = vld [vmem:[%s169 + $0x4] sm:$0xf]
        %v174 = vld [vmem:[%s169 + $0x8] sm:$0xf]
        %v175 = vld [vmem:[%s169 + $0xc] sm:$0xf]
        %v176 = vld [vmem:[%s169 + $0x10] sm:$0xf]
        %v177 = vld [vmem:[%s169 + $0x14] sm:$0xf]
        %v178 = vld [vmem:[%s169 + $0x18] sm:$0xf]
        %v179 = vld [vmem:[%s169 + $0x1c] sm:$0xf]
        %v180 = vld [vmem:[%s169 + $0x20] sm:$0xf]
        %v181 = vld [vmem:[%s169 + $0x24] sm:$0xf]
        %v182 = vld [vmem:[%s169 + $0x28] sm:$0xf]
        %v183 = vld [vmem:[%s169 + $0x2c] sm:$0xf]
        %v184 = vld [vmem:[%s169 + $0x30] sm:$0xf]
        %v185 = vld [vmem:[%s169 + $0x34] sm:$0xf]
        %v186 = vld [vmem:[%s169 + $0x38] sm:$0xf]
        %v187 = vld [vmem:[%s169 + $0x3c] sm:$0xf]
        %v188 = vld [vmem:[%s169 + $0x40] sm:$0xf]
        %v189 = vld [vmem:[%s169 + $0x44] sm:$0xf]
        %v190 = vld [vmem:[%s169 + $0x48] sm:$0xf]
        %v191 = vld [vmem:[%s169 + $0x4c] sm:$0xf]
        %v192 = vld [vmem:[%s169 + $0x50] sm:$0xf]
        %v193 = vld [vmem:[%s169 + $0x54] sm:$0xf]
        %v194 = vld [vmem:[%s169 + $0x58] sm:$0xf]
        %v195 = vld [vmem:[%s169 + $0x5c] sm:$0xf]
        %v196 = vld [vmem:[%s169 + $0x60] sm:$0xf]
        %v197 = vld [vmem:[%s169 + $0x64] sm:$0xf]
        %v198 = vld [vmem:[%s169 + $0x68] sm:$0xf]
        %v199 = vld [vmem:[%s169 + $0x6c] sm:$0xf]
        %v200 = vld [vmem:[%s169 + $0x70] sm:$0xf]
        %v201 = vld [vmem:[%s169 + $0x74] sm:$0xf]
        %v202 = vld [vmem:[%s169 + $0x78] sm:$0xf]
        %v203 = vld [vmem:[%s169 + $0x7c] sm:$0xf]
        %v204 = vld [vmem:[%s169 + $0x80] sm:$0xf]
        %v205 = vld [vmem:[%s169 + $0x84] sm:$0xf]
        %v206 = vld [vmem:[%s169 + $0x88] sm:$0xf]
        %v207 = vld [vmem:[%s169 + $0x8c] sm:$0xf]
        %v208 = vld [vmem:[%s169 + $0x90] sm:$0xf]
        %v209 = vld [vmem:[%s169 + $0x94] sm:$0xf]
        %v210 = vld [vmem:[%s169 + $0x98] sm:$0xf]
        %v211 = vld [vmem:[%s169 + $0x9c] sm:$0xf]
        %v212 = vld [vmem:[%s169 + $0xa0] sm:$0xf]
        %v213 = vld [vmem:[%s169 + $0xa4] sm:$0xf]
        %v214 = vld [vmem:[%s169 + $0xa8] sm:$0xf]
        %v215 = vld [vmem:[%s169 + $0xac] sm:$0xf]
        %v216 = vld [vmem:[%s169 + $0xb0] sm:$0xf]
        %v217 = vld [vmem:[%s169 + $0xb4] sm:$0xf]
        %v218 = vld [vmem:[%s169 + $0xb8] sm:$0xf]
        %v219 = vld [vmem:[%s169 + $0xbc] sm:$0xf]
        %v220 = vld [vmem:[%s169 + $0xc0] sm:$0xf]
        %v221 = vld [vmem:[%s169 + $0xc4] sm:$0xf]
        %v222 = vld [vmem:[%s169 + $0xc8] sm:$0xf]
        %v223 = vld [vmem:[%s169 + $0xcc] sm:$0xf]
        %v224 = vld [vmem:[%s169 + $0xd0] sm:$0xf]
        %v225 = vld [vmem:[%s169 + $0xd4] sm:$0xf]
        %v226 = vld [vmem:[%s169 + $0xd8] sm:$0xf]
        %v227 = vld [vmem:[%s169 + $0xdc] sm:$0xf]
        %v228 = vld [vmem:[%s169 + $0xe0] sm:$0xf]
        %v229 = vld [vmem:[%s169 + $0xe4] sm:$0xf]
        %v230 = vld [vmem:[%s169 + $0xe8] sm:$0xf]
        %v231 = vld [vmem:[%s169 + $0xec] sm:$0xf]
        %v232 = vld [vmem:[%s169 + $0xf0] sm:$0xf]
        %v233 = vld [vmem:[%s169 + $0xf4] sm:$0xf]
        %v234 = vld [vmem:[%s169 + $0xf8] sm:$0xf]
        %v235 = vld [vmem:[%s169 + $0xfc] sm:$0xf]
        %v236 = vld [vmem:[%s169 + $0x100] sm:$0xf]
        %v237 = vld [vmem:[%s169 + $0x104] sm:$0xf]
        %v238 = vld [vmem:[%s169 + $0x108] sm:$0xf]
        %v239 = vld [vmem:[%s169 + $0x10c] sm:$0xf]
        %v240 = vld [vmem:[%s169 + $0x110] sm:$0xf]
        %v241 = vld [vmem:[%s169 + $0x114] sm:$0xf]
        %v242 = vld [vmem:[%s169 + $0x118] sm:$0xf]
        %v243 = vld [vmem:[%s169 + $0x11c] sm:$0xf]
        %v244 = vld [vmem:[%s169 + $0x120] sm:$0xf]
        %v245 = vld [vmem:[%s169 + $0x124] sm:$0xf]
        %v246 = vld [vmem:[%s169 + $0x128] sm:$0xf]
        %v247 = vld [vmem:[%s169 + $0x12c] sm:$0xf]
        %v248 = vld [vmem:[%s169 + $0x130] sm:$0xf]
        %v249 = vld [vmem:[%s169 + $0x134] sm:$0xf]
        %v250 = vld [vmem:[%s169 + $0x138] sm:$0xf]
        %v251 = vld [vmem:[%s169 + $0x13c] sm:$0xf]
        %v252 = vld [vmem:[%s169 + $0x140] sm:$0xf]
        %v253 = vld [vmem:[%s169 + $0x144] sm:$0xf]
        %v254 = vld [vmem:[%s169 + $0x148] sm:$0xf]
        %v255 = vld [vmem:[%s169 + $0x14c] sm:$0xf]
        %v256 = vld [vmem:[%s169 + $0x150] sm:$0xf]
        %v257 = vld [vmem:[%s169 + $0x154] sm:$0xf]
        %v258 = vld [vmem:[%s169 + $0x158] sm:$0xf]
        %v259 = vld [vmem:[%s169 + $0x15c] sm:$0xf]
        %v260 = vld [vmem:[%s169 + $0x160] sm:$0xf]
        %v261 = vld [vmem:[%s169 + $0x164] sm:$0xf]
        %v262 = vld [vmem:[%s169 + $0x168] sm:$0xf]
        %v263 = vld [vmem:[%s169 + $0x16c] sm:$0xf]
        %v264 = vld [vmem:[%s169 + $0x170] sm:$0xf]
        %v265 = vld [vmem:[%s169 + $0x174] sm:$0xf]
        %v266 = vld [vmem:[%s169 + $0x178] sm:$0xf]
        %v267 = vld [vmem:[%s169 + $0x17c] sm:$0xf]
        %v268 = vld [vmem:[%s169 + $0x180] sm:$0xf]
        %v269 = vld [vmem:[%s169 + $0x184] sm:$0xf]
        %v270 = vld [vmem:[%s169 + $0x188] sm:$0xf]
        %v271 = vld [vmem:[%s169 + $0x18c] sm:$0xf]
        %v272 = vld [vmem:[%s169 + $0x190] sm:$0xf]
        %v273 = vld [vmem:[%s169 + $0x194] sm:$0xf]
        %v274 = vld [vmem:[%s169 + $0x198] sm:$0xf]
        %v275 = vld [vmem:[%s169 + $0x19c] sm:$0xf]
        %v276 = vld [vmem:[%s169 + $0x1a0] sm:$0xf]
        %v277 = vld [vmem:[%s169 + $0x1a4] sm:$0xf]
        %v278 = vld [vmem:[%s169 + $0x1a8] sm:$0xf]
        %v279 = vld [vmem:[%s169 + $0x1ac] sm:$0xf]
        %v280 = vld [vmem:[%s169 + $0x1b0] sm:$0xf]
        %v281 = vld [vmem:[%s169 + $0x1b4] sm:$0xf]
        %v282 = vld [vmem:[%s169 + $0x1b8] sm:$0xf]
        %v283 = vld [vmem:[%s169 + $0x1bc] sm:$0xf]
        %v284 = vld [vmem:[%s169 + $0x1c0] sm:$0xf]
        %v285 = vld [vmem:[%s169 + $0x1c4] sm:$0xf]
        %v286 = vld [vmem:[%s169 + $0x1c8] sm:$0xf]
        %v287 = vld [vmem:[%s169 + $0x1cc] sm:$0xf]
        %v288 = vld [vmem:[%s169 + $0x1d0] sm:$0xf]
        %v289 = vld [vmem:[%s169 + $0x1d4] sm:$0xf]
        %v290 = vld [vmem:[%s169 + $0x1d8] sm:$0xf]
        %v291 = vld [vmem:[%s169 + $0x1dc] sm:$0xf]
        %v292 = vld [vmem:[%s169 + $0x1e0] sm:$0xf]
        %v293 = vld [vmem:[%s169 + $0x1e4] sm:$0xf]
        %v294 = vld [vmem:[%s169 + $0x1e8] sm:$0xf]
        %v295 = vld [vmem:[%s169 + $0x1ec] sm:$0xf]
        %v296 = vld [vmem:[%s169 + $0x1f0] sm:$0xf]
        %v297 = vld [vmem:[%s169 + $0x1f4] sm:$0xf]
        %v298 = vld [vmem:[%s169 + $0x1f8] sm:$0xf]
        %v299 = vld [vmem:[%s169 + $0x1fc] sm:$0xf]
        %v300 = vld [vmem:[%s169 + $0x200] sm:$0xf]
        %v301 = vld [vmem:[%s169 + $0x204] sm:$0xf]
        %v302 = vld [vmem:[%s169 + $0x208] sm:$0xf]
        %v303 = vld [vmem:[%s169 + $0x20c] sm:$0xf]
        %v304 = vld [vmem:[%s169 + $0x210] sm:$0xf]
        %v305 = vld [vmem:[%s169 + $0x214] sm:$0xf]
        %v306 = vld [vmem:[%s169 + $0x218] sm:$0xf]
        %v307 = vld [vmem:[%s169 + $0x21c] sm:$0xf]
        %v308 = vld [vmem:[%s169 + $0x220] sm:$0xf]
        %v309 = vld [vmem:[%s169 + $0x224] sm:$0xf]
        %v310 = vld [vmem:[%s169 + $0x228] sm:$0xf]
        %v311 = vld [vmem:[%s169 + $0x22c] sm:$0xf]
        %v312 = vld [vmem:[%s169 + $0x230] sm:$0xf]
        %v313 = vld [vmem:[%s169 + $0x234] sm:$0xf]
        %v314 = vld [vmem:[%s169 + $0x238] sm:$0xf]
        %v315 = vld [vmem:[%s169 + $0x23c] sm:$0xf]
        %v316 = vld [vmem:[%s169 + $0x240] sm:$0xf]
        %v317 = vld [vmem:[%s169 + $0x244] sm:$0xf]
        %v318 = vld [vmem:[%s169 + $0x248] sm:$0xf]
        %v319 = vld [vmem:[%s169 + $0x24c] sm:$0xf]
        %v320 = vld [vmem:[%s169 + $0x250] sm:$0xf]
        %v321 = vld [vmem:[%s169 + $0x254] sm:$0xf]
        %v322 = vld [vmem:[%s169 + $0x258] sm:$0xf]
        %v323 = vld [vmem:[%s169 + $0x25c] sm:$0xf]
        %v324 = vld [vmem:[%s169 + $0x260] sm:$0xf]
        %v325 = vld [vmem:[%s169 + $0x264] sm:$0xf]
        %v326 = vld [vmem:[%s169 + $0x268] sm:$0xf]
        %v327 = vld [vmem:[%s169 + $0x26c] sm:$0xf]
        %v328 = vld [vmem:[%s169 + $0x270] sm:$0xf]
        %v329 = vld [vmem:[%s169 + $0x274] sm:$0xf]
        %v330 = vld [vmem:[%s169 + $0x278] sm:$0xf]
        %v331 = vld [vmem:[%s169 + $0x27c] sm:$0xf]
        %v332 = vld [vmem:[%s169 + $0x280] sm:$0xf]
        %v333 = vld [vmem:[%s169 + $0x284] sm:$0xf]
        %v334 = vld [vmem:[%s169 + $0x288] sm:$0xf]
        %v335 = vld [vmem:[%s169 + $0x28c] sm:$0xf]
        %v336 = vld [vmem:[%s169 + $0x290] sm:$0xf]
        %v337 = vld [vmem:[%s169 + $0x294] sm:$0xf]
        %v338 = vld [vmem:[%s169 + $0x298] sm:$0xf]
        %v339 = vld [vmem:[%s169 + $0x29c] sm:$0xf]
        %v340 = vld [vmem:[%s169 + $0x2a0] sm:$0xf]
        %v341 = vld [vmem:[%s169 + $0x2a4] sm:$0xf]
        %v342 = vld [vmem:[%s169 + $0x2a8] sm:$0xf]
        %v343 = vld [vmem:[%s169 + $0x2ac] sm:$0xf]
        %v344 = vld [vmem:[%s169 + $0x2b0] sm:$0xf]
        %v345 = vld [vmem:[%s169 + $0x2b4] sm:$0xf]
        %v346 = vld [vmem:[%s169 + $0x2b8] sm:$0xf]
        %v347 = vld [vmem:[%s169 + $0x2bc] sm:$0xf]
        %v348 = vld [vmem:[%s169 + $0x2c0] sm:$0xf]
        %v349 = vld [vmem:[%s169 + $0x2c4] sm:$0xf]
        %v350 = vld [vmem:[%s169 + $0x2c8] sm:$0xf]
        %v351 = vld [vmem:[%s169 + $0x2cc] sm:$0xf]
        %v352 = vld [vmem:[%s169 + $0x2d0] sm:$0xf]
        %v353 = vld [vmem:[%s169 + $0x2d4] sm:$0xf]
        %v354 = vld [vmem:[%s169 + $0x2d8] sm:$0xf]
        %v355 = vld [vmem:[%s169 + $0x2dc] sm:$0xf]
        %v356 = vld [vmem:[%s169 + $0x2e0] sm:$0xf]
        %v357 = vld [vmem:[%s169 + $0x2e4] sm:$0xf]
        %v358 = vld [vmem:[%s169 + $0x2e8] sm:$0xf]
        %v359 = vld [vmem:[%s169 + $0x2ec] sm:$0xf]
        %v360 = vld [vmem:[%s169 + $0x2f0] sm:$0xf]
        %v361 = vld [vmem:[%s169 + $0x2f4] sm:$0xf]
        %v362 = vld [vmem:[%s169 + $0x2f8] sm:$0xf]
        %v363 = vld [vmem:[%s169 + $0x2fc] sm:$0xf]
        %v364 = vld [vmem:[%s169 + $0x300] sm:$0xf]
        %v365 = vld [vmem:[%s169 + $0x304] sm:$0xf]
        %v366 = vld [vmem:[%s169 + $0x308] sm:$0xf]
        %v367 = vld [vmem:[%s169 + $0x30c] sm:$0xf]
        %v368 = vld [vmem:[%s169 + $0x310] sm:$0xf]
        %v369 = vld [vmem:[%s169 + $0x314] sm:$0xf]
        %v370 = vld [vmem:[%s169 + $0x318] sm:$0xf]
        %v371 = vld [vmem:[%s169 + $0x31c] sm:$0xf]
        %v372 = vld [vmem:[%s169 + $0x320] sm:$0xf]
        %v373 = vld [vmem:[%s169 + $0x324] sm:$0xf]
        %v374 = vld [vmem:[%s169 + $0x328] sm:$0xf]
        %v375 = vld [vmem:[%s169 + $0x32c] sm:$0xf]
        %v376 = vld [vmem:[%s169 + $0x330] sm:$0xf]
        %v377 = vld [vmem:[%s169 + $0x334] sm:$0xf]
        %v378 = vld [vmem:[%s169 + $0x338] sm:$0xf]
        %v379 = vld [vmem:[%s169 + $0x33c] sm:$0xf]
        %v380 = vld [vmem:[%s169 + $0x340] sm:$0xf]
        %v381 = vld [vmem:[%s169 + $0x344] sm:$0xf]
        %v382 = vld [vmem:[%s169 + $0x348] sm:$0xf]
        %v383 = vld [vmem:[%s169 + $0x34c] sm:$0xf]
        %v384 = vld [vmem:[%s169 + $0x350] sm:$0xf]
        %v385 = vld [vmem:[%s169 + $0x354] sm:$0xf]
        %v386 = vld [vmem:[%s169 + $0x358] sm:$0xf]
        %v387 = vld [vmem:[%s169 + $0x35c] sm:$0xf]
        %v388 = vld [vmem:[%s169 + $0x360] sm:$0xf]
        %v389 = vld [vmem:[%s169 + $0x364] sm:$0xf]
        %v390 = vld [vmem:[%s169 + $0x368] sm:$0xf]
        %v391 = vld [vmem:[%s169 + $0x36c] sm:$0xf]
        %v392 = vld [vmem:[%s169 + $0x370] sm:$0xf]
        %v393 = vld [vmem:[%s169 + $0x374] sm:$0xf]
        %v394 = vld [vmem:[%s169 + $0x378] sm:$0xf]
        %v395 = vld [vmem:[%s169 + $0x37c] sm:$0xf]
        %v396 = vld [vmem:[%s169 + $0x380] sm:$0xf]
        %v397 = vld [vmem:[%s169 + $0x384] sm:$0xf]
        %v398 = vld [vmem:[%s169 + $0x388] sm:$0xf]
        %v399 = vld [vmem:[%s169 + $0x38c] sm:$0xf]
        %v400 = vld [vmem:[%s169 + $0x390] sm:$0xf]
        %v401 = vld [vmem:[%s169 + $0x394] sm:$0xf]
        %v402 = vld [vmem:[%s169 + $0x398] sm:$0xf]
        %v403 = vld [vmem:[%s169 + $0x39c] sm:$0xf]
        %v404 = vld [vmem:[%s169 + $0x3a0] sm:$0xf]
        %v405 = vld [vmem:[%s169 + $0x3a4] sm:$0xf]
        %v406 = vld [vmem:[%s169 + $0x3a8] sm:$0xf]
        %v407 = vld [vmem:[%s169 + $0x3ac] sm:$0xf]
        %v408 = vld [vmem:[%s169 + $0x3b0] sm:$0xf]
        %v409 = vld [vmem:[%s169 + $0x3b4] sm:$0xf]
        %v410 = vld [vmem:[%s169 + $0x3b8] sm:$0xf]
        %v411 = vld [vmem:[%s169 + $0x3bc] sm:$0xf]
        %v412 = vld [vmem:[%s169 + $0x3c0] sm:$0xf]
        %v413 = vld [vmem:[%s169 + $0x3c4] sm:$0xf]
        %v414 = vld [vmem:[%s169 + $0x3c8] sm:$0xf]
        %v415 = vld [vmem:[%s169 + $0x3cc] sm:$0xf]
        %v416 = vld [vmem:[%s169 + $0x3d0] sm:$0xf]
        %v417 = vld [vmem:[%s169 + $0x3d4] sm:$0xf]
        %v418 = vld [vmem:[%s169 + $0x3d8] sm:$0xf]
        %v419 = vld [vmem:[%s169 + $0x3dc] sm:$0xf]
        %v420 = vld [vmem:[%s169 + $0x3e0] sm:$0xf]
        %v421 = vld [vmem:[%s169 + $0x3e4] sm:$0xf]
        %v422 = vld [vmem:[%s169 + $0x3e8] sm:$0xf]
        %v423 = vld [vmem:[%s169 + $0x3ec] sm:$0xf]
        %v424 = vld [vmem:[%s169 + $0x3f0] sm:$0xf]
        %v425 = vld [vmem:[%s169 + $0x3f4] sm:$0xf]
        %v426 = vld [vmem:[%s169 + $0x3f8] sm:$0xf]
        %v427 = vld [vmem:[%s169 + $0x3fc] sm:$0xf]
        %v428 = vld [vmem:[%s1] sm:$0xf]
        %v429 = vld [vmem:[%s1 + $0x4] sm:$0xf]
        %v430 = vld [vmem:[%s1 + $0x8] sm:$0xf]
        %v431 = vld [vmem:[%s1 + $0xc] sm:$0xf]
        %v432 = vld [vmem:[%s1 + $0x10] sm:$0x3]
        %v433 = vld [vmem:[%s2] sm:$0x1]
        %v435 = vperm.slane %v433, 0
        %v693 = vunpack.c.l.b16 %v172
        %v694 = vunpack.c.l.b16 %v173
        %v695 = vunpack.c.l.b16 %v174
        %v696 = vunpack.c.l.b16 %v175
        %v697 = vunpack.c.l.b16 %v176
        %v698 = vunpack.c.l.b16 %v177
        %v699 = vunpack.c.l.b16 %v178
        %v700 = vunpack.c.l.b16 %v179
        %v701 = vunpack.c.l.b16 %v180
        %v702 = vunpack.c.l.b16 %v181
        %v703 = vunpack.c.l.b16 %v182
        %v704 = vunpack.c.l.b16 %v183
        %v705 = vunpack.c.l.b16 %v184
        %v706 = vunpack.c.l.b16 %v185
        %v707 = vunpack.c.l.b16 %v186
        %v708 = vunpack.c.l.b16 %v187
        %v709 = vunpack.c.l.b16 %v188
        %v710 = vunpack.c.l.b16 %v189
        %v711 = vunpack.c.l.b16 %v190
        %v712 = vunpack.c.l.b16 %v191
        %v713 = vunpack.c.l.b16 %v192
        %v714 = vunpack.c.l.b16 %v193
        %v715 = vunpack.c.l.b16 %v194
        %v716 = vunpack.c.l.b16 %v195
        %v717 = vunpack.c.l.b16 %v196
        %v718 = vunpack.c.l.b16 %v197
        %v719 = vunpack.c.l.b16 %v198
        %v720 = vunpack.c.l.b16 %v199
        %v721 = vunpack.c.l.b16 %v200
        %v722 = vunpack.c.l.b16 %v201
        %v723 = vunpack.c.l.b16 %v202
        %v724 = vunpack.c.l.b16 %v203
        %v725 = vunpack.c.l.b16 %v204
        %v726 = vunpack.c.l.b16 %v205
        %v727 = vunpack.c.l.b16 %v206
        %v728 = vunpack.c.l.b16 %v207
        %v729 = vunpack.c.l.b16 %v208
        %v730 = vunpack.c.l.b16 %v209
        %v731 = vunpack.c.l.b16 %v210
        %v732 = vunpack.c.l.b16 %v211
        %v733 = vunpack.c.l.b16 %v212
        %v734 = vunpack.c.l.b16 %v213
        %v735 = vunpack.c.l.b16 %v214
        %v736 = vunpack.c.l.b16 %v215
        %v737 = vunpack.c.l.b16 %v216
        %v738 = vunpack.c.l.b16 %v217
        %v739 = vunpack.c.l.b16 %v218
        %v740 = vunpack.c.l.b16 %v219
        %v741 = vunpack.c.l.b16 %v220
        %v742 = vunpack.c.l.b16 %v221
        %v743 = vunpack.c.l.b16 %v222
        %v744 = vunpack.c.l.b16 %v223
        %v745 = vunpack.c.l.b16 %v224
        %v746 = vunpack.c.l.b16 %v225
        %v747 = vunpack.c.l.b16 %v226
        %v748 = vunpack.c.l.b16 %v227
        %v749 = vunpack.c.l.b16 %v228
        %v750 = vunpack.c.l.b16 %v229
        %v751 = vunpack.c.l.b16 %v230
        %v752 = vunpack.c.l.b16 %v231
        %v753 = vunpack.c.l.b16 %v232
        %v754 = vunpack.c.l.b16 %v233
        %v755 = vunpack.c.l.b16 %v234
        %v756 = vunpack.c.l.b16 %v235
        %v757 = vunpack.c.l.b16 %v236
        %v758 = vunpack.c.l.b16 %v237
        %v759 = vunpack.c.l.b16 %v238
        %v760 = vunpack.c.l.b16 %v239
        %v761 = vunpack.c.l.b16 %v240
        %v762 = vunpack.c.l.b16 %v241
        %v763 = vunpack.c.l.b16 %v242
        %v764 = vunpack.c.l.b16 %v243
        %v765 = vunpack.c.l.b16 %v244
        %v766 = vunpack.c.l.b16 %v245
        %v767 = vunpack.c.l.b16 %v246
        %v768 = vunpack.c.l.b16 %v247
        %v769 = vunpack.c.l.b16 %v248
        %v770 = vunpack.c.l.b16 %v249
        %v771 = vunpack.c.l.b16 %v250
        %v772 = vunpack.c.l.b16 %v251
        %v773 = vunpack.c.l.b16 %v252
        %v774 = vunpack.c.l.b16 %v253
        %v775 = vunpack.c.l.b16 %v254
        %v776 = vunpack.c.l.b16 %v255
        %v777 = vunpack.c.l.b16 %v256
        %v778 = vunpack.c.l.b16 %v257
        %v779 = vunpack.c.l.b16 %v258
        %v780 = vunpack.c.l.b16 %v259
        %v781 = vunpack.c.l.b16 %v260
        %v782 = vunpack.c.l.b16 %v261
        %v783 = vunpack.c.l.b16 %v262
        %v784 = vunpack.c.l.b16 %v263
        %v785 = vunpack.c.l.b16 %v264
        %v786 = vunpack.c.l.b16 %v265
        %v787 = vunpack.c.l.b16 %v266
        %v788 = vunpack.c.l.b16 %v267
        %v789 = vunpack.c.l.b16 %v268
        %v790 = vunpack.c.l.b16 %v269
        %v791 = vunpack.c.l.b16 %v270
        %v792 = vunpack.c.l.b16 %v271
        %v793 = vunpack.c.l.b16 %v272
        %v794 = vunpack.c.l.b16 %v273
        %v795 = vunpack.c.l.b16 %v274
        %v796 = vunpack.c.l.b16 %v275
        %v797 = vunpack.c.l.b16 %v276
        %v798 = vunpack.c.l.b16 %v277
        %v799 = vunpack.c.l.b16 %v278
        %v800 = vunpack.c.l.b16 %v279
        %v801 = vunpack.c.l.b16 %v280
        %v802 = vunpack.c.l.b16 %v281
        %v803 = vunpack.c.l.b16 %v282
        %v804 = vunpack.c.l.b16 %v283
        %v805 = vunpack.c.l.b16 %v284
        %v806 = vunpack.c.l.b16 %v285
        %v807 = vunpack.c.l.b16 %v286
        %v808 = vunpack.c.l.b16 %v287
        %v809 = vunpack.c.l.b16 %v288
        %v810 = vunpack.c.l.b16 %v289
        %v811 = vunpack.c.l.b16 %v290
        %v812 = vunpack.c.l.b16 %v291
        %v813 = vunpack.c.l.b16 %v292
        %v814 = vunpack.c.l.b16 %v293
        %v815 = vunpack.c.l.b16 %v294
        %v816 = vunpack.c.l.b16 %v295
        %v817 = vunpack.c.l.b16 %v296
        %v818 = vunpack.c.l.b16 %v297
        %v819 = vunpack.c.l.b16 %v298
        %v820 = vunpack.c.l.b16 %v299
        %v821 = vunpack.c.l.b16 %v300
        %v822 = vunpack.c.l.b16 %v301
        %v823 = vunpack.c.l.b16 %v302
        %v824 = vunpack.c.l.b16 %v303
        %v825 = vunpack.c.l.b16 %v304
        %v826 = vunpack.c.l.b16 %v305
        %v827 = vunpack.c.l.b16 %v306
        %v828 = vunpack.c.l.b16 %v307
        %v829 = vunpack.c.l.b16 %v308
        %v830 = vunpack.c.l.b16 %v309
        %v831 = vunpack.c.l.b16 %v310
        %v832 = vunpack.c.l.b16 %v311
        %v833 = vunpack.c.l.b16 %v312
        %v834 = vunpack.c.l.b16 %v313
        %v835 = vunpack.c.l.b16 %v314
        %v836 = vunpack.c.l.b16 %v315
        %v837 = vunpack.c.l.b16 %v316
        %v838 = vunpack.c.l.b16 %v317
        %v839 = vunpack.c.l.b16 %v318
        %v840 = vunpack.c.l.b16 %v319
        %v841 = vunpack.c.l.b16 %v320
        %v842 = vunpack.c.l.b16 %v321
        %v843 = vunpack.c.l.b16 %v322
        %v844 = vunpack.c.l.b16 %v323
        %v845 = vunpack.c.l.b16 %v324
        %v846 = vunpack.c.l.b16 %v325
        %v847 = vunpack.c.l.b16 %v326
        %v848 = vunpack.c.l.b16 %v327
        %v849 = vunpack.c.l.b16 %v328
        %v850 = vunpack.c.l.b16 %v329
        %v851 = vunpack.c.l.b16 %v330
        %v852 = vunpack.c.l.b16 %v331
        %v853 = vunpack.c.l.b16 %v332
        %v854 = vunpack.c.l.b16 %v333
        %v855 = vunpack.c.l.b16 %v334
        %v856 = vunpack.c.l.b16 %v335
        %v857 = vunpack.c.l.b16 %v336
        %v858 = vunpack.c.l.b16 %v337
        %v859 = vunpack.c.l.b16 %v338
        %v860 = vunpack.c.l.b16 %v339
        %v861 = vunpack.c.l.b16 %v340
        %v862 = vunpack.c.l.b16 %v341
        %v863 = vunpack.c.l.b16 %v342
        %v864 = vunpack.c.l.b16 %v343
        %v865 = vunpack.c.l.b16 %v344
        %v866 = vunpack.c.l.b16 %v345
        %v867 = vunpack.c.l.b16 %v346
        %v868 = vunpack.c.l.b16 %v347
        %v869 = vunpack.c.l.b16 %v348
        %v870 = vunpack.c.l.b16 %v349
        %v871 = vunpack.c.l.b16 %v350
        %v872 = vunpack.c.l.b16 %v351
        %v873 = vunpack.c.l.b16 %v352
        %v874 = vunpack.c.l.b16 %v353
        %v875 = vunpack.c.l.b16 %v354
        %v876 = vunpack.c.l.b16 %v355
        %v877 = vunpack.c.l.b16 %v356
        %v878 = vunpack.c.l.b16 %v357
        %v879 = vunpack.c.l.b16 %v358
        %v880 = vunpack.c.l.b16 %v359
        %v881 = vunpack.c.l.b16 %v360
        %v882 = vunpack.c.l.b16 %v361
        %v883 = vunpack.c.l.b16 %v362
        %v884 = vunpack.c.l.b16 %v363
        %v885 = vunpack.c.l.b16 %v364
        %v886 = vunpack.c.l.b16 %v365
        %v887 = vunpack.c.l.b16 %v366
        %v888 = vunpack.c.l.b16 %v367
        %v889 = vunpack.c.l.b16 %v368
        %v890 = vunpack.c.l.b16 %v369
        %v891 = vunpack.c.l.b16 %v370
        %v892 = vunpack.c.l.b16 %v371
        %v893 = vunpack.c.l.b16 %v372
        %v894 = vunpack.c.l.b16 %v373
        %v895 = vunpack.c.l.b16 %v374
        %v896 = vunpack.c.l.b16 %v375
        %v897 = vunpack.c.l.b16 %v376
        %v898 = vunpack.c.l.b16 %v377
        %v899 = vunpack.c.l.b16 %v378
        %v900 = vunpack.c.l.b16 %v379
        %v901 = vunpack.c.l.b16 %v380
        %v902 = vunpack.c.l.b16 %v381
        %v903 = vunpack.c.l.b16 %v382
        %v904 = vunpack.c.l.b16 %v383
        %v905 = vunpack.c.l.b16 %v384
        %v906 = vunpack.c.l.b16 %v385
        %v907 = vunpack.c.l.b16 %v386
        %v908 = vunpack.c.l.b16 %v387
        %v909 = vunpack.c.l.b16 %v388
        %v910 = vunpack.c.l.b16 %v389
        %v911 = vunpack.c.l.b16 %v390
        %v912 = vunpack.c.l.b16 %v391
        %v913 = vunpack.c.l.b16 %v392
        %v914 = vunpack.c.l.b16 %v393
        %v915 = vunpack.c.l.b16 %v394
        %v916 = vunpack.c.l.b16 %v395
        %v917 = vunpack.c.l.b16 %v396
        %v918 = vunpack.c.l.b16 %v397
        %v919 = vunpack.c.l.b16 %v398
        %v920 = vunpack.c.l.b16 %v399
        %v921 = vunpack.c.l.b16 %v400
        %v922 = vunpack.c.l.b16 %v401
        %v923 = vunpack.c.l.b16 %v402
        %v924 = vunpack.c.l.b16 %v403
        %v925 = vunpack.c.l.b16 %v404
        %v926 = vunpack.c.l.b16 %v405
        %v927 = vunpack.c.l.b16 %v406
        %v928 = vunpack.c.l.b16 %v407
        %v929 = vunpack.c.l.b16 %v408
        %v930 = vunpack.c.l.b16 %v409
        %v931 = vunpack.c.l.b16 %v410
        %v932 = vunpack.c.l.b16 %v411
        %v933 = vunpack.c.l.b16 %v412
        %v934 = vunpack.c.l.b16 %v413
        %v935 = vunpack.c.l.b16 %v414
        %v936 = vunpack.c.l.b16 %v415
        %v937 = vunpack.c.l.b16 %v416
        %v938 = vunpack.c.l.b16 %v417
        %v939 = vunpack.c.l.b16 %v418
        %v940 = vunpack.c.l.b16 %v419
        %v941 = vunpack.c.l.b16 %v420
        %v942 = vunpack.c.l.b16 %v421
        %v943 = vunpack.c.l.b16 %v422
        %v944 = vunpack.c.l.b16 %v423
        %v945 = vunpack.c.l.b16 %v424
        %v946 = vunpack.c.l.b16 %v425
        %v947 = vunpack.c.l.b16 %v426
        %v948 = vunpack.c.l.b16 %v427
        %v949 = vpack.c.b16 %v694, %v693
        %v950 = vpack.c.b16 %v696, %v695
        %v951 = vpack.c.b16 %v698, %v697
        %v952 = vpack.c.b16 %v700, %v699
        %v953 = vpack.c.b16 %v702, %v701
        %v954 = vpack.c.b16 %v704, %v703
        %v955 = vpack.c.b16 %v706, %v705
        %v956 = vpack.c.b16 %v708, %v707
        %v957 = vpack.c.b16 %v710, %v709
        %v958 = vpack.c.b16 %v712, %v711
        %v959 = vpack.c.b16 %v714, %v713
        %v960 = vpack.c.b16 %v716, %v715
        %v961 = vpack.c.b16 %v718, %v717
        %v962 = vpack.c.b16 %v720, %v719
        %v963 = vpack.c.b16 %v722, %v721
        %v964 = vpack.c.b16 %v724, %v723
        %v965 = vpack.c.b16 %v726, %v725
        %v966 = vpack.c.b16 %v728, %v727
        %v967 = vpack.c.b16 %v730, %v729
        %v968 = vpack.c.b16 %v732, %v731
        %v969 = vpack.c.b16 %v734, %v733
        %v970 = vpack.c.b16 %v736, %v735
        %v971 = vpack.c.b16 %v738, %v737
        %v972 = vpack.c.b16 %v740, %v739
        %v973 = vpack.c.b16 %v742, %v741
        %v974 = vpack.c.b16 %v744, %v743
        %v975 = vpack.c.b16 %v746, %v745
        %v976 = vpack.c.b16 %v748, %v747
        %v977 = vpack.c.b16 %v750, %v749
        %v978 = vpack.c.b16 %v752, %v751
        %v979 = vpack.c.b16 %v754, %v753
        %v980 = vpack.c.b16 %v756, %v755
        %v981 = vpack.c.b16 %v758, %v757
        %v982 = vpack.c.b16 %v760, %v759
        %v983 = vpack.c.b16 %v762, %v761
        %v984 = vpack.c.b16 %v764, %v763
        %v985 = vpack.c.b16 %v766, %v765
        %v986 = vpack.c.b16 %v768, %v767
        %v987 = vpack.c.b16 %v770, %v769
        %v988 = vpack.c.b16 %v772, %v771
        %v989 = vpack.c.b16 %v774, %v773
        %v990 = vpack.c.b16 %v776, %v775
        %v991 = vpack.c.b16 %v778, %v777
        %v992 = vpack.c.b16 %v780, %v779
        %v993 = vpack.c.b16 %v782, %v781
        %v994 = vpack.c.b16 %v784, %v783
        %v995 = vpack.c.b16 %v786, %v785
        %v996 = vpack.c.b16 %v788, %v787
        %v997 = vpack.c.b16 %v790, %v789
        %v998 = vpack.c.b16 %v792, %v791
        %v999 = vpack.c.b16 %v794, %v793
        %v1000 = vpack.c.b16 %v796, %v795
        %v1001 = vpack.c.b16 %v798, %v797
        %v1002 = vpack.c.b16 %v800, %v799
        %v1003 = vpack.c.b16 %v802, %v801
        %v1004 = vpack.c.b16 %v804, %v803
        %v1005 = vpack.c.b16 %v806, %v805
        %v1006 = vpack.c.b16 %v808, %v807
        %v1007 = vpack.c.b16 %v810, %v809
        %v1008 = vpack.c.b16 %v812, %v811
        %v1009 = vpack.c.b16 %v814, %v813
        %v1010 = vpack.c.b16 %v816, %v815
        %v1011 = vpack.c.b16 %v818, %v817
        %v1012 = vpack.c.b16 %v820, %v819
        %v1013 = vpack.c.b16 %v822, %v821
        %v1014 = vpack.c.b16 %v824, %v823
        %v1015 = vpack.c.b16 %v826, %v825
        %v1016 = vpack.c.b16 %v828, %v827
        %v1017 = vpack.c.b16 %v830, %v829
        %v1018 = vpack.c.b16 %v832, %v831
        %v1019 = vpack.c.b16 %v834, %v833
        %v1020 = vpack.c.b16 %v836, %v835
        %v1021 = vpack.c.b16 %v838, %v837
        %v1022 = vpack.c.b16 %v840, %v839
        %v1023 = vpack.c.b16 %v842, %v841
        %v1024 = vpack.c.b16 %v844, %v843
        %v1025 = vpack.c.b16 %v846, %v845
        %v1026 = vpack.c.b16 %v848, %v847
        %v1027 = vpack.c.b16 %v850, %v849
        %v1028 = vpack.c.b16 %v852, %v851
        %v1029 = vpack.c.b16 %v854, %v853
        %v1030 = vpack.c.b16 %v856, %v855
        %v1031 = vpack.c.b16 %v858, %v857
        %v1032 = vpack.c.b16 %v860, %v859
        %v1033 = vpack.c.b16 %v862, %v861
        %v1034 = vpack.c.b16 %v864, %v863
        %v1035 = vpack.c.b16 %v866, %v865
        %v1036 = vpack.c.b16 %v868, %v867
        %v1037 = vpack.c.b16 %v870, %v869
        %v1038 = vpack.c.b16 %v872, %v871
        %v1039 = vpack.c.b16 %v874, %v873
        %v1040 = vpack.c.b16 %v876, %v875
        %v1041 = vpack.c.b16 %v878, %v877
        %v1042 = vpack.c.b16 %v880, %v879
        %v1043 = vpack.c.b16 %v882, %v881
        %v1044 = vpack.c.b16 %v884, %v883
        %v1045 = vpack.c.b16 %v886, %v885
        %v1046 = vpack.c.b16 %v888, %v887
        %v1047 = vpack.c.b16 %v890, %v889
        %v1048 = vpack.c.b16 %v892, %v891
        %v1049 = vpack.c.b16 %v894, %v893
        %v1050 = vpack.c.b16 %v896, %v895
        %v1051 = vpack.c.b16 %v898, %v897
        %v1052 = vpack.c.b16 %v900, %v899
        %v1053 = vpack.c.b16 %v902, %v901
        %v1054 = vpack.c.b16 %v904, %v903
        %v1055 = vpack.c.b16 %v906, %v905
        %v1056 = vpack.c.b16 %v908, %v907
        %v1057 = vpack.c.b16 %v910, %v909
        %v1058 = vpack.c.b16 %v912, %v911
        %v1059 = vpack.c.b16 %v914, %v913
        %v1060 = vpack.c.b16 %v916, %v915
        %v1061 = vpack.c.b16 %v918, %v917
        %v1062 = vpack.c.b16 %v920, %v919
        %v1063 = vpack.c.b16 %v922, %v921
        %v1064 = vpack.c.b16 %v924, %v923
        %v1065 = vpack.c.b16 %v926, %v925
        %v1066 = vpack.c.b16 %v928, %v927
        %v1067 = vpack.c.b16 %v930, %v929
        %v1068 = vpack.c.b16 %v932, %v931
        %v1069 = vpack.c.b16 %v934, %v933
        %v1070 = vpack.c.b16 %v936, %v935
        %v1071 = vpack.c.b16 %v938, %v937
        %v1072 = vpack.c.b16 %v940, %v939
        %v1073 = vpack.c.b16 %v942, %v941
        %v1074 = vpack.c.b16 %v944, %v943
        %v1075 = vpack.c.b16 %v946, %v945
        %v1076 = vpack.c.b16 %v948, %v947
        %v1082 = vunpack.c.l.b16 %v428
        %v1083 = vunpack.c.l.b16 %v429
        %v1084 = vunpack.c.l.b16 %v430
        %v1085 = vunpack.c.l.b16 %v431
        %v1086 = vunpack.c.l.b16 %v432
        %v1087 = vpack.c.b16 %v1083, %v1082
        %v1088 = vpack.c.b16 %v1085, %v1084
        %v1089 = vpack.c.b16 %v1086, %v1086
        %vm1092 = vcmask 293888
        %v1094 = vsel %vm1092, %v949, 0
        %v1097 = vsel %vm1092, %v950, 0
        %v1100 = vsel %vm1092, %v951, 0
        %v1103 = vsel %vm1092, %v952, 0
        %v1106 = vsel %vm1092, %v953, 0
        %v1109 = vsel %vm1092, %v954, 0
        %v1112 = vsel %vm1092, %v955, 0
        %v1115 = vsel %vm1092, %v956, 0
        %v1118 = vsel %vm1092, %v957, 0
        %v1121 = vsel %vm1092, %v958, 0
        %v1124 = vsel %vm1092, %v959, 0
        %v1127 = vsel %vm1092, %v960, 0
        %v1130 = vsel %vm1092, %v961, 0
        %v1133 = vsel %vm1092, %v962, 0
        %v1136 = vsel %vm1092, %v963, 0
        %v1139 = vsel %vm1092, %v964, 0
        %v1142 = vsel %vm1092, %v965, 0
        %v1145 = vsel %vm1092, %v966, 0
        %v1148 = vsel %vm1092, %v967, 0
        %v1151 = vsel %vm1092, %v968, 0
        %v1154 = vsel %vm1092, %v969, 0
        %v1157 = vsel %vm1092, %v970, 0
        %v1160 = vsel %vm1092, %v971, 0
        %v1163 = vsel %vm1092, %v972, 0
        %v1166 = vsel %vm1092, %v973, 0
        %v1169 = vsel %vm1092, %v974, 0
        %v1172 = vsel %vm1092, %v975, 0
        %v1175 = vsel %vm1092, %v976, 0
        %v1178 = vsel %vm1092, %v977, 0
        %v1181 = vsel %vm1092, %v978, 0
        %v1184 = vsel %vm1092, %v979, 0
        %v1187 = vsel %vm1092, %v980, 0
        %v1190 = vsel %vm1092, %v981, 0
        %v1193 = vsel %vm1092, %v982, 0
        %v1196 = vsel %vm1092, %v983, 0
        %v1199 = vsel %vm1092, %v984, 0
        %v1202 = vsel %vm1092, %v985, 0
        %v1205 = vsel %vm1092, %v986, 0
        %v1208 = vsel %vm1092, %v987, 0
        %v1211 = vsel %vm1092, %v988, 0
        %v1214 = vsel %vm1092, %v989, 0
        %v1217 = vsel %vm1092, %v990, 0
        %v1220 = vsel %vm1092, %v991, 0
        %v1223 = vsel %vm1092, %v992, 0
        %v1226 = vsel %vm1092, %v993, 0
        %v1229 = vsel %vm1092, %v994, 0
        %v1232 = vsel %vm1092, %v995, 0
        %v1235 = vsel %vm1092, %v996, 0
        %v1238 = vsel %vm1092, %v997, 0
        %v1241 = vsel %vm1092, %v998, 0
        %v1244 = vsel %vm1092, %v999, 0
        %v1247 = vsel %vm1092, %v1000, 0
        %v1250 = vsel %vm1092, %v1001, 0
        %v1253 = vsel %vm1092, %v1002, 0
        %v1256 = vsel %vm1092, %v1003, 0
        %v1259 = vsel %vm1092, %v1004, 0
        %v1262 = vsel %vm1092, %v1005, 0
        %v1265 = vsel %vm1092, %v1006, 0
        %v1268 = vsel %vm1092, %v1007, 0
        %v1271 = vsel %vm1092, %v1008, 0
        %v1274 = vsel %vm1092, %v1009, 0
        %v1277 = vsel %vm1092, %v1010, 0
        %v1280 = vsel %vm1092, %v1011, 0
        %v1283 = vsel %vm1092, %v1012, 0
        %v1286 = vsel %vm1092, %v1013, 0
        %v1289 = vsel %vm1092, %v1014, 0
        %v1292 = vsel %vm1092, %v1015, 0
        %v1295 = vsel %vm1092, %v1016, 0
        %v1298 = vsel %vm1092, %v1017, 0
        %v1301 = vsel %vm1092, %v1018, 0
        %v1304 = vsel %vm1092, %v1019, 0
        %v1307 = vsel %vm1092, %v1020, 0
        %v1310 = vsel %vm1092, %v1021, 0
        %v1313 = vsel %vm1092, %v1022, 0
        %v1316 = vsel %vm1092, %v1023, 0
        %v1319 = vsel %vm1092, %v1024, 0
        %v1322 = vsel %vm1092, %v1025, 0
        %v1325 = vsel %vm1092, %v1026, 0
        %v1328 = vsel %vm1092, %v1027, 0
        %v1331 = vsel %vm1092, %v1028, 0
        %v1334 = vsel %vm1092, %v1029, 0
        %v1337 = vsel %vm1092, %v1030, 0
        %v1340 = vsel %vm1092, %v1031, 0
        %v1343 = vsel %vm1092, %v1032, 0
        %v1346 = vsel %vm1092, %v1033, 0
        %v1349 = vsel %vm1092, %v1034, 0
        %v1352 = vsel %vm1092, %v1035, 0
        %v1355 = vsel %vm1092, %v1036, 0
        %v1358 = vsel %vm1092, %v1037, 0
        %v1361 = vsel %vm1092, %v1038, 0
        %v1364 = vsel %vm1092, %v1039, 0
        %v1367 = vsel %vm1092, %v1040, 0
        %v1370 = vsel %vm1092, %v1041, 0
        %v1373 = vsel %vm1092, %v1042, 0
        %v1376 = vsel %vm1092, %v1043, 0
        %v1379 = vsel %vm1092, %v1044, 0
        %v1382 = vsel %vm1092, %v1045, 0
        %v1385 = vsel %vm1092, %v1046, 0
        %v1388 = vsel %vm1092, %v1047, 0
        %v1391 = vsel %vm1092, %v1048, 0
        %v1394 = vsel %vm1092, %v1049, 0
        %v1397 = vsel %vm1092, %v1050, 0
        %v1400 = vsel %vm1092, %v1051, 0
        %v1403 = vsel %vm1092, %v1052, 0
        %v1406 = vsel %vm1092, %v1053, 0
        %v1409 = vsel %vm1092, %v1054, 0
        %v1412 = vsel %vm1092, %v1055, 0
        %v1415 = vsel %vm1092, %v1056, 0
        %v1418 = vsel %vm1092, %v1057, 0
        %v1421 = vsel %vm1092, %v1058, 0
        %v1424 = vsel %vm1092, %v1059, 0
        %v1427 = vsel %vm1092, %v1060, 0
        %v1430 = vsel %vm1092, %v1061, 0
        %v1433 = vsel %vm1092, %v1062, 0
        %v1436 = vsel %vm1092, %v1063, 0
        %v1439 = vsel %vm1092, %v1064, 0
        %v1442 = vsel %vm1092, %v1065, 0
        %v1445 = vsel %vm1092, %v1066, 0
        %v1448 = vsel %vm1092, %v1067, 0
        %v1451 = vsel %vm1092, %v1068, 0
        %v1454 = vsel %vm1092, %v1069, 0
        %v1457 = vsel %vm1092, %v1070, 0
        %v1460 = vsel %vm1092, %v1071, 0
        %v1463 = vsel %vm1092, %v1072, 0
        %v1466 = vsel %vm1092, %v1073, 0
        %v1469 = vsel %vm1092, %v1074, 0
        %v1472 = vsel %vm1092, %v1075, 0
        %v1475 = vsel %vm1092, %v1076, 0
        %vm1477 = vcmask 1041408
        %v1479 = vsel %vm1477, %v1089, 0
        %1481 = vmatpush.bf16.msra.mxu0 0
        %1482 = vmatpush.bf16.msra.mxu0 0
        %1483 = vmatpush.bf16.msra.mxu0 0
        %1484 = vmatpush.bf16.msra.mxu0 0
        %1485 = vmatpush.bf16.msra.mxu0 0
        %1486 = vmatpush.bf16.msra.mxu0 %v1479
        %1487 = vmatpush.bf16.msra.mxu0 %v1088
        %1488 = vmatpush.bf16.msra.mxu0 %v1087
        %1489 = vmatmul.bf16.gmra.mxu0 %v1094
        %v1490 = vpop.f32.mrf.mxu0
        %v1491 = vadd.f32 %v435, %v1490
        %v1492 = vpop.f32.mrf.mxu0
        %v1493 = vadd.f32 %v435, %v1492
        %1494 = vmatmul.bf16.gmra.mxu0 %v1097
        %v1495 = vpop.f32.mrf.mxu0
        %v1496 = vadd.f32 %v435, %v1495
        %v1497 = vpop.f32.mrf.mxu0
        %v1498 = vadd.f32 %v435, %v1497
        %1499 = vmatmul.bf16.gmra.mxu0 %v1100
        %v1500 = vpop.f32.mrf.mxu0
        %v1501 = vadd.f32 %v435, %v1500
        %v1502 = vpop.f32.mrf.mxu0
        %v1503 = vadd.f32 %v435, %v1502
        %1504 = vmatmul.bf16.gmra.mxu0 %v1103
        %v1505 = vpop.f32.mrf.mxu0
        %v1506 = vadd.f32 %v435, %v1505
        %v1507 = vpop.f32.mrf.mxu0
        %v1508 = vadd.f32 %v435, %v1507
        %1509 = vmatmul.bf16.gmra.mxu0 %v1106
        %v1510 = vpop.f32.mrf.mxu0
        %v1511 = vadd.f32 %v435, %v1510
        %v1512 = vpop.f32.mrf.mxu0
        %v1513 = vadd.f32 %v435, %v1512
        %1514 = vmatmul.bf16.gmra.mxu0 %v1109
        %v1515 = vpop.f32.mrf.mxu0
        %v1516 = vadd.f32 %v435, %v1515
        %v1517 = vpop.f32.mrf.mxu0
        %v1518 = vadd.f32 %v435, %v1517
        %1519 = vmatmul.bf16.gmra.mxu0 %v1112
        %v1520 = vpop.f32.mrf.mxu0
        %v1521 = vadd.f32 %v435, %v1520
        %v1522 = vpop.f32.mrf.mxu0
        %v1523 = vadd.f32 %v435, %v1522
        %1524 = vmatmul.bf16.gmra.mxu0 %v1115
        %v1525 = vpop.f32.mrf.mxu0
        %v1526 = vadd.f32 %v435, %v1525
        %v1527 = vpop.f32.mrf.mxu0
        %v1528 = vadd.f32 %v435, %v1527
        %1529 = vmatmul.bf16.gmra.mxu0 %v1118
        %v1530 = vpop.f32.mrf.mxu0
        %v1531 = vadd.f32 %v435, %v1530
        %v1532 = vpop.f32.mrf.mxu0
        %v1533 = vadd.f32 %v435, %v1532
        %1534 = vmatmul.bf16.gmra.mxu0 %v1121
        %v1535 = vpop.f32.mrf.mxu0
        %v1536 = vadd.f32 %v435, %v1535
        %v1537 = vpop.f32.mrf.mxu0
        %v1538 = vadd.f32 %v435, %v1537
        %1539 = vmatmul.bf16.gmra.mxu0 %v1124
        %v1540 = vpop.f32.mrf.mxu0
        %v1541 = vadd.f32 %v435, %v1540
        %v1542 = vpop.f32.mrf.mxu0
        %v1543 = vadd.f32 %v435, %v1542
        %1544 = vmatmul.bf16.gmra.mxu0 %v1127
        %v1545 = vpop.f32.mrf.mxu0
        %v1546 = vadd.f32 %v435, %v1545
        %v1547 = vpop.f32.mrf.mxu0
        %v1548 = vadd.f32 %v435, %v1547
        %1549 = vmatmul.bf16.gmra.mxu0 %v1130
        %v1550 = vpop.f32.mrf.mxu0
        %v1551 = vadd.f32 %v435, %v1550
        %v1552 = vpop.f32.mrf.mxu0
        %v1553 = vadd.f32 %v435, %v1552
        %1554 = vmatmul.bf16.gmra.mxu0 %v1133
        %v1555 = vpop.f32.mrf.mxu0
        %v1556 = vadd.f32 %v435, %v1555
        %v1557 = vpop.f32.mrf.mxu0
        %v1558 = vadd.f32 %v435, %v1557
        %1559 = vmatmul.bf16.gmra.mxu0 %v1136
        %v1560 = vpop.f32.mrf.mxu0
        %v1561 = vadd.f32 %v435, %v1560
        %v1562 = vpop.f32.mrf.mxu0
        %v1563 = vadd.f32 %v435, %v1562
        %1564 = vmatmul.bf16.gmra.mxu0 %v1139
        %v1565 = vpop.f32.mrf.mxu0
        %v1566 = vadd.f32 %v435, %v1565
        %v1567 = vpop.f32.mrf.mxu0
        %v1568 = vadd.f32 %v435, %v1567
        %1569 = vmatmul.bf16.gmra.mxu0 %v1142
        %v1570 = vpop.f32.mrf.mxu0
        %v1571 = vadd.f32 %v435, %v1570
        %v1572 = vpop.f32.mrf.mxu0
        %v1573 = vadd.f32 %v435, %v1572
        %1574 = vmatmul.bf16.gmra.mxu0 %v1145
        %v1575 = vpop.f32.mrf.mxu0
        %v1576 = vadd.f32 %v435, %v1575
        %v1577 = vpop.f32.mrf.mxu0
        %v1578 = vadd.f32 %v435, %v1577
        %1579 = vmatmul.bf16.gmra.mxu0 %v1148
        %v1580 = vpop.f32.mrf.mxu0
        %v1581 = vadd.f32 %v435, %v1580
        %v1582 = vpop.f32.mrf.mxu0
        %v1583 = vadd.f32 %v435, %v1582
        %1584 = vmatmul.bf16.gmra.mxu0 %v1151
        %v1585 = vpop.f32.mrf.mxu0
        %v1586 = vadd.f32 %v435, %v1585
        %v1587 = vpop.f32.mrf.mxu0
        %v1588 = vadd.f32 %v435, %v1587
        %1589 = vmatmul.bf16.gmra.mxu0 %v1154
        %v1590 = vpop.f32.mrf.mxu0
        %v1591 = vadd.f32 %v435, %v1590
        %v1592 = vpop.f32.mrf.mxu0
        %v1593 = vadd.f32 %v435, %v1592
        %1594 = vmatmul.bf16.gmra.mxu0 %v1157
        %v1595 = vpop.f32.mrf.mxu0
        %v1596 = vadd.f32 %v435, %v1595
        %v1597 = vpop.f32.mrf.mxu0
        %v1598 = vadd.f32 %v435, %v1597
        %1599 = vmatmul.bf16.gmra.mxu0 %v1160
        %v1600 = vpop.f32.mrf.mxu0
        %v1601 = vadd.f32 %v435, %v1600
        %v1602 = vpop.f32.mrf.mxu0
        %v1603 = vadd.f32 %v435, %v1602
        %1604 = vmatmul.bf16.gmra.mxu0 %v1163
        %v1605 = vpop.f32.mrf.mxu0
        %v1606 = vadd.f32 %v435, %v1605
        %v1607 = vpop.f32.mrf.mxu0
        %v1608 = vadd.f32 %v435, %v1607
        %1609 = vmatmul.bf16.gmra.mxu0 %v1166
        %v1610 = vpop.f32.mrf.mxu0
        %v1611 = vadd.f32 %v435, %v1610
        %v1612 = vpop.f32.mrf.mxu0
        %v1613 = vadd.f32 %v435, %v1612
        %1614 = vmatmul.bf16.gmra.mxu0 %v1169
        %v1615 = vpop.f32.mrf.mxu0
        %v1616 = vadd.f32 %v435, %v1615
        %v1617 = vpop.f32.mrf.mxu0
        %v1618 = vadd.f32 %v435, %v1617
        %1619 = vmatmul.bf16.gmra.mxu0 %v1172
        %v1620 = vpop.f32.mrf.mxu0
        %v1621 = vadd.f32 %v435, %v1620
        %v1622 = vpop.f32.mrf.mxu0
        %v1623 = vadd.f32 %v435, %v1622
        %1624 = vmatmul.bf16.gmra.mxu0 %v1175
        %v1625 = vpop.f32.mrf.mxu0
        %v1626 = vadd.f32 %v435, %v1625
        %v1627 = vpop.f32.mrf.mxu0
        %v1628 = vadd.f32 %v435, %v1627
        %1629 = vmatmul.bf16.gmra.mxu0 %v1178
        %v1630 = vpop.f32.mrf.mxu0
        %v1631 = vadd.f32 %v435, %v1630
        %v1632 = vpop.f32.mrf.mxu0
        %v1633 = vadd.f32 %v435, %v1632
        %1634 = vmatmul.bf16.gmra.mxu0 %v1181
        %v1635 = vpop.f32.mrf.mxu0
        %v1636 = vadd.f32 %v435, %v1635
        %v1637 = vpop.f32.mrf.mxu0
        %v1638 = vadd.f32 %v435, %v1637
        %1639 = vmatmul.bf16.gmra.mxu0 %v1184
        %v1640 = vpop.f32.mrf.mxu0
        %v1641 = vadd.f32 %v435, %v1640
        %v1642 = vpop.f32.mrf.mxu0
        %v1643 = vadd.f32 %v435, %v1642
        %1644 = vmatmul.bf16.gmra.mxu0 %v1187
        %v1645 = vpop.f32.mrf.mxu0
        %v1646 = vadd.f32 %v435, %v1645
        %v1647 = vpop.f32.mrf.mxu0
        %v1648 = vadd.f32 %v435, %v1647
        %1649 = vmatmul.bf16.gmra.mxu0 %v1190
        %v1650 = vpop.f32.mrf.mxu0
        %v1651 = vadd.f32 %v435, %v1650
        %v1652 = vpop.f32.mrf.mxu0
        %v1653 = vadd.f32 %v435, %v1652
        %1654 = vmatmul.bf16.gmra.mxu0 %v1193
        %v1655 = vpop.f32.mrf.mxu0
        %v1656 = vadd.f32 %v435, %v1655
        %v1657 = vpop.f32.mrf.mxu0
        %v1658 = vadd.f32 %v435, %v1657
        %1659 = vmatmul.bf16.gmra.mxu0 %v1196
        %v1660 = vpop.f32.mrf.mxu0
        %v1661 = vadd.f32 %v435, %v1660
        %v1662 = vpop.f32.mrf.mxu0
        %v1663 = vadd.f32 %v435, %v1662
        %1664 = vmatmul.bf16.gmra.mxu0 %v1199
        %v1665 = vpop.f32.mrf.mxu0
        %v1666 = vadd.f32 %v435, %v1665
        %v1667 = vpop.f32.mrf.mxu0
        %v1668 = vadd.f32 %v435, %v1667
        %1669 = vmatmul.bf16.gmra.mxu0 %v1202
        %v1670 = vpop.f32.mrf.mxu0
        %v1671 = vadd.f32 %v435, %v1670
        %v1672 = vpop.f32.mrf.mxu0
        %v1673 = vadd.f32 %v435, %v1672
        %1674 = vmatmul.bf16.gmra.mxu0 %v1205
        %v1675 = vpop.f32.mrf.mxu0
        %v1676 = vadd.f32 %v435, %v1675
        %v1677 = vpop.f32.mrf.mxu0
        %v1678 = vadd.f32 %v435, %v1677
        %1679 = vmatmul.bf16.gmra.mxu0 %v1208
        %v1680 = vpop.f32.mrf.mxu0
        %v1681 = vadd.f32 %v435, %v1680
        %v1682 = vpop.f32.mrf.mxu0
        %v1683 = vadd.f32 %v435, %v1682
        %1684 = vmatmul.bf16.gmra.mxu0 %v1211
        %v1685 = vpop.f32.mrf.mxu0
        %v1686 = vadd.f32 %v435, %v1685
        %v1687 = vpop.f32.mrf.mxu0
        %v1688 = vadd.f32 %v435, %v1687
        %1689 = vmatmul.bf16.gmra.mxu0 %v1214
        %v1690 = vpop.f32.mrf.mxu0
        %v1691 = vadd.f32 %v435, %v1690
        %v1692 = vpop.f32.mrf.mxu0
        %v1693 = vadd.f32 %v435, %v1692
        %1694 = vmatmul.bf16.gmra.mxu0 %v1217
        %v1695 = vpop.f32.mrf.mxu0
        %v1696 = vadd.f32 %v435, %v1695
        %v1697 = vpop.f32.mrf.mxu0
        %v1698 = vadd.f32 %v435, %v1697
        %1699 = vmatmul.bf16.gmra.mxu0 %v1220
        %v1700 = vpop.f32.mrf.mxu0
        %v1701 = vadd.f32 %v435, %v1700
        %v1702 = vpop.f32.mrf.mxu0
        %v1703 = vadd.f32 %v435, %v1702
        %1704 = vmatmul.bf16.gmra.mxu0 %v1223
        %v1705 = vpop.f32.mrf.mxu0
        %v1706 = vadd.f32 %v435, %v1705
        %v1707 = vpop.f32.mrf.mxu0
        %v1708 = vadd.f32 %v435, %v1707
        %1709 = vmatmul.bf16.gmra.mxu0 %v1226
        %v1710 = vpop.f32.mrf.mxu0
        %v1711 = vadd.f32 %v435, %v1710
        %v1712 = vpop.f32.mrf.mxu0
        %v1713 = vadd.f32 %v435, %v1712
        %1714 = vmatmul.bf16.gmra.mxu0 %v1229
        %v1715 = vpop.f32.mrf.mxu0
        %v1716 = vadd.f32 %v435, %v1715
        %v1717 = vpop.f32.mrf.mxu0
        %v1718 = vadd.f32 %v435, %v1717
        %1719 = vmatmul.bf16.gmra.mxu0 %v1232
        %v1720 = vpop.f32.mrf.mxu0
        %v1721 = vadd.f32 %v435, %v1720
        %v1722 = vpop.f32.mrf.mxu0
        %v1723 = vadd.f32 %v435, %v1722
        %1724 = vmatmul.bf16.gmra.mxu0 %v1235
        %v1725 = vpop.f32.mrf.mxu0
        %v1726 = vadd.f32 %v435, %v1725
        %v1727 = vpop.f32.mrf.mxu0
        %v1728 = vadd.f32 %v435, %v1727
        %1729 = vmatmul.bf16.gmra.mxu0 %v1238
        %v1730 = vpop.f32.mrf.mxu0
        %v1731 = vadd.f32 %v435, %v1730
        %v1732 = vpop.f32.mrf.mxu0
        %v1733 = vadd.f32 %v435, %v1732
        %1734 = vmatmul.bf16.gmra.mxu0 %v1241
        %v1735 = vpop.f32.mrf.mxu0
        %v1736 = vadd.f32 %v435, %v1735
        %v1737 = vpop.f32.mrf.mxu0
        %v1738 = vadd.f32 %v435, %v1737
        %1739 = vmatmul.bf16.gmra.mxu0 %v1244
        %v1740 = vpop.f32.mrf.mxu0
        %v1741 = vadd.f32 %v435, %v1740
        %v1742 = vpop.f32.mrf.mxu0
        %v1743 = vadd.f32 %v435, %v1742
        %1744 = vmatmul.bf16.gmra.mxu0 %v1247
        %v1745 = vpop.f32.mrf.mxu0
        %v1746 = vadd.f32 %v435, %v1745
        %v1747 = vpop.f32.mrf.mxu0
        %v1748 = vadd.f32 %v435, %v1747
        %1749 = vmatmul.bf16.gmra.mxu0 %v1250
        %v1750 = vpop.f32.mrf.mxu0
        %v1751 = vadd.f32 %v435, %v1750
        %v1752 = vpop.f32.mrf.mxu0
        %v1753 = vadd.f32 %v435, %v1752
        %1754 = vmatmul.bf16.gmra.mxu0 %v1253
        %v1755 = vpop.f32.mrf.mxu0
        %v1756 = vadd.f32 %v435, %v1755
        %v1757 = vpop.f32.mrf.mxu0
        %v1758 = vadd.f32 %v435, %v1757
        %1759 = vmatmul.bf16.gmra.mxu0 %v1256
        %v1760 = vpop.f32.mrf.mxu0
        %v1761 = vadd.f32 %v435, %v1760
        %v1762 = vpop.f32.mrf.mxu0
        %v1763 = vadd.f32 %v435, %v1762
        %1764 = vmatmul.bf16.gmra.mxu0 %v1259
        %v1765 = vpop.f32.mrf.mxu0
        %v1766 = vadd.f32 %v435, %v1765
        %v1767 = vpop.f32.mrf.mxu0
        %v1768 = vadd.f32 %v435, %v1767
        %1769 = vmatmul.bf16.gmra.mxu0 %v1262
        %v1770 = vpop.f32.mrf.mxu0
        %v1771 = vadd.f32 %v435, %v1770
        %v1772 = vpop.f32.mrf.mxu0
        %v1773 = vadd.f32 %v435, %v1772
        %1774 = vmatmul.bf16.gmra.mxu0 %v1265
        %v1775 = vpop.f32.mrf.mxu0
        %v1776 = vadd.f32 %v435, %v1775
        %v1777 = vpop.f32.mrf.mxu0
        %v1778 = vadd.f32 %v435, %v1777
        %1779 = vmatmul.bf16.gmra.mxu0 %v1268
        %v1780 = vpop.f32.mrf.mxu0
        %v1781 = vadd.f32 %v435, %v1780
        %v1782 = vpop.f32.mrf.mxu0
        %v1783 = vadd.f32 %v435, %v1782
        %1784 = vmatmul.bf16.gmra.mxu0 %v1271
        %v1785 = vpop.f32.mrf.mxu0
        %v1786 = vadd.f32 %v435, %v1785
        %v1787 = vpop.f32.mrf.mxu0
        %v1788 = vadd.f32 %v435, %v1787
        %1789 = vmatmul.bf16.gmra.mxu0 %v1274
        %v1790 = vpop.f32.mrf.mxu0
        %v1791 = vadd.f32 %v435, %v1790
        %v1792 = vpop.f32.mrf.mxu0
        %v1793 = vadd.f32 %v435, %v1792
        %1794 = vmatmul.bf16.gmra.mxu0 %v1277
        %v1795 = vpop.f32.mrf.mxu0
        %v1796 = vadd.f32 %v435, %v1795
        %v1797 = vpop.f32.mrf.mxu0
        %v1798 = vadd.f32 %v435, %v1797
        %1799 = vmatmul.bf16.gmra.mxu0 %v1280
        %v1800 = vpop.f32.mrf.mxu0
        %v1801 = vadd.f32 %v435, %v1800
        %v1802 = vpop.f32.mrf.mxu0
        %v1803 = vadd.f32 %v435, %v1802
        %1804 = vmatmul.bf16.gmra.mxu0 %v1283
        %v1805 = vpop.f32.mrf.mxu0
        %v1806 = vadd.f32 %v435, %v1805
        %v1807 = vpop.f32.mrf.mxu0
        %v1808 = vadd.f32 %v435, %v1807
        %1809 = vmatmul.bf16.gmra.mxu0 %v1286
        %v1810 = vpop.f32.mrf.mxu0
        %v1811 = vadd.f32 %v435, %v1810
        %v1812 = vpop.f32.mrf.mxu0
        %v1813 = vadd.f32 %v435, %v1812
        %1814 = vmatmul.bf16.gmra.mxu0 %v1289
        %v1815 = vpop.f32.mrf.mxu0
        %v1816 = vadd.f32 %v435, %v1815
        %v1817 = vpop.f32.mrf.mxu0
        %v1818 = vadd.f32 %v435, %v1817
        %1819 = vmatmul.bf16.gmra.mxu0 %v1292
        %v1820 = vpop.f32.mrf.mxu0
        %v1821 = vadd.f32 %v435, %v1820
        %v1822 = vpop.f32.mrf.mxu0
        %v1823 = vadd.f32 %v435, %v1822
        %1824 = vmatmul.bf16.gmra.mxu0 %v1295
        %v1825 = vpop.f32.mrf.mxu0
        %v1826 = vadd.f32 %v435, %v1825
        %v1827 = vpop.f32.mrf.mxu0
        %v1828 = vadd.f32 %v435, %v1827
        %1829 = vmatmul.bf16.gmra.mxu0 %v1298
        %v1830 = vpop.f32.mrf.mxu0
        %v1831 = vadd.f32 %v435, %v1830
        %v1832 = vpop.f32.mrf.mxu0
        %v1833 = vadd.f32 %v435, %v1832
        %1834 = vmatmul.bf16.gmra.mxu0 %v1301
        %v1835 = vpop.f32.mrf.mxu0
        %v1836 = vadd.f32 %v435, %v1835
        %v1837 = vpop.f32.mrf.mxu0
        %v1838 = vadd.f32 %v435, %v1837
        %1839 = vmatmul.bf16.gmra.mxu0 %v1304
        %v1840 = vpop.f32.mrf.mxu0
        %v1841 = vadd.f32 %v435, %v1840
        %v1842 = vpop.f32.mrf.mxu0
        %v1843 = vadd.f32 %v435, %v1842
        %1844 = vmatmul.bf16.gmra.mxu0 %v1307
        %v1845 = vpop.f32.mrf.mxu0
        %v1846 = vadd.f32 %v435, %v1845
        %v1847 = vpop.f32.mrf.mxu0
        %v1848 = vadd.f32 %v435, %v1847
        %1849 = vmatmul.bf16.gmra.mxu0 %v1310
        %v1850 = vpop.f32.mrf.mxu0
        %v1851 = vadd.f32 %v435, %v1850
        %v1852 = vpop.f32.mrf.mxu0
        %v1853 = vadd.f32 %v435, %v1852
        %1854 = vmatmul.bf16.gmra.mxu0 %v1313
        %v1855 = vpop.f32.mrf.mxu0
        %v1856 = vadd.f32 %v435, %v1855
        %v1857 = vpop.f32.mrf.mxu0
        %v1858 = vadd.f32 %v435, %v1857
        %1859 = vmatmul.bf16.gmra.mxu0 %v1316
        %v1860 = vpop.f32.mrf.mxu0
        %v1861 = vadd.f32 %v435, %v1860
        %v1862 = vpop.f32.mrf.mxu0
        %v1863 = vadd.f32 %v435, %v1862
        %1864 = vmatmul.bf16.gmra.mxu0 %v1319
        %v1865 = vpop.f32.mrf.mxu0
        %v1866 = vadd.f32 %v435, %v1865
        %v1867 = vpop.f32.mrf.mxu0
        %v1868 = vadd.f32 %v435, %v1867
        %1869 = vmatmul.bf16.gmra.mxu0 %v1322
        %v1870 = vpop.f32.mrf.mxu0
        %v1871 = vadd.f32 %v435, %v1870
        %v1872 = vpop.f32.mrf.mxu0
        %v1873 = vadd.f32 %v435, %v1872
        %1874 = vmatmul.bf16.gmra.mxu0 %v1325
        %v1875 = vpop.f32.mrf.mxu0
        %v1876 = vadd.f32 %v435, %v1875
        %v1877 = vpop.f32.mrf.mxu0
        %v1878 = vadd.f32 %v435, %v1877
        %1879 = vmatmul.bf16.gmra.mxu0 %v1328
        %v1880 = vpop.f32.mrf.mxu0
        %v1881 = vadd.f32 %v435, %v1880
        %v1882 = vpop.f32.mrf.mxu0
        %v1883 = vadd.f32 %v435, %v1882
        %1884 = vmatmul.bf16.gmra.mxu0 %v1331
        %v1885 = vpop.f32.mrf.mxu0
        %v1886 = vadd.f32 %v435, %v1885
        %v1887 = vpop.f32.mrf.mxu0
        %v1888 = vadd.f32 %v435, %v1887
        %1889 = vmatmul.bf16.gmra.mxu0 %v1334
        %v1890 = vpop.f32.mrf.mxu0
        %v1891 = vadd.f32 %v435, %v1890
        %v1892 = vpop.f32.mrf.mxu0
        %v1893 = vadd.f32 %v435, %v1892
        %1894 = vmatmul.bf16.gmra.mxu0 %v1337
        %v1895 = vpop.f32.mrf.mxu0
        %v1896 = vadd.f32 %v435, %v1895
        %v1897 = vpop.f32.mrf.mxu0
        %v1898 = vadd.f32 %v435, %v1897
        %1899 = vmatmul.bf16.gmra.mxu0 %v1340
        %v1900 = vpop.f32.mrf.mxu0
        %v1901 = vadd.f32 %v435, %v1900
        %v1902 = vpop.f32.mrf.mxu0
        %v1903 = vadd.f32 %v435, %v1902
        %1904 = vmatmul.bf16.gmra.mxu0 %v1343
        %v1905 = vpop.f32.mrf.mxu0
        %v1906 = vadd.f32 %v435, %v1905
        %v1907 = vpop.f32.mrf.mxu0
        %v1908 = vadd.f32 %v435, %v1907
        %1909 = vmatmul.bf16.gmra.mxu0 %v1346
        %v1910 = vpop.f32.mrf.mxu0
        %v1911 = vadd.f32 %v435, %v1910
        %v1912 = vpop.f32.mrf.mxu0
        %v1913 = vadd.f32 %v435, %v1912
        %1914 = vmatmul.bf16.gmra.mxu0 %v1349
        %v1915 = vpop.f32.mrf.mxu0
        %v1916 = vadd.f32 %v435, %v1915
        %v1917 = vpop.f32.mrf.mxu0
        %v1918 = vadd.f32 %v435, %v1917
        %1919 = vmatmul.bf16.gmra.mxu0 %v1352
        %v1920 = vpop.f32.mrf.mxu0
        %v1921 = vadd.f32 %v435, %v1920
        %v1922 = vpop.f32.mrf.mxu0
        %v1923 = vadd.f32 %v435, %v1922
        %1924 = vmatmul.bf16.gmra.mxu0 %v1355
        %v1925 = vpop.f32.mrf.mxu0
        %v1926 = vadd.f32 %v435, %v1925
        %v1927 = vpop.f32.mrf.mxu0
        %v1928 = vadd.f32 %v435, %v1927
        %1929 = vmatmul.bf16.gmra.mxu0 %v1358
        %v1930 = vpop.f32.mrf.mxu0
        %v1931 = vadd.f32 %v435, %v1930
        %v1932 = vpop.f32.mrf.mxu0
        %v1933 = vadd.f32 %v435, %v1932
        %1934 = vmatmul.bf16.gmra.mxu0 %v1361
        %v1935 = vpop.f32.mrf.mxu0
        %v1936 = vadd.f32 %v435, %v1935
        %v1937 = vpop.f32.mrf.mxu0
        %v1938 = vadd.f32 %v435, %v1937
        %1939 = vmatmul.bf16.gmra.mxu0 %v1364
        %v1940 = vpop.f32.mrf.mxu0
        %v1941 = vadd.f32 %v435, %v1940
        %v1942 = vpop.f32.mrf.mxu0
        %v1943 = vadd.f32 %v435, %v1942
        %1944 = vmatmul.bf16.gmra.mxu0 %v1367
        %v1945 = vpop.f32.mrf.mxu0
        %v1946 = vadd.f32 %v435, %v1945
        %v1947 = vpop.f32.mrf.mxu0
        %v1948 = vadd.f32 %v435, %v1947
        %1949 = vmatmul.bf16.gmra.mxu0 %v1370
        %v1950 = vpop.f32.mrf.mxu0
        %v1951 = vadd.f32 %v435, %v1950
        %v1952 = vpop.f32.mrf.mxu0
        %v1953 = vadd.f32 %v435, %v1952
        %1954 = vmatmul.bf16.gmra.mxu0 %v1373
        %v1955 = vpop.f32.mrf.mxu0
        %v1956 = vadd.f32 %v435, %v1955
        %v1957 = vpop.f32.mrf.mxu0
        %v1958 = vadd.f32 %v435, %v1957
        %1959 = vmatmul.bf16.gmra.mxu0 %v1376
        %v1960 = vpop.f32.mrf.mxu0
        %v1961 = vadd.f32 %v435, %v1960
        %v1962 = vpop.f32.mrf.mxu0
        %v1963 = vadd.f32 %v435, %v1962
        %1964 = vmatmul.bf16.gmra.mxu0 %v1379
        %v1965 = vpop.f32.mrf.mxu0
        %v1966 = vadd.f32 %v435, %v1965
        %v1967 = vpop.f32.mrf.mxu0
        %v1968 = vadd.f32 %v435, %v1967
        %1969 = vmatmul.bf16.gmra.mxu0 %v1382
        %v1970 = vpop.f32.mrf.mxu0
        %v1971 = vadd.f32 %v435, %v1970
        %v1972 = vpop.f32.mrf.mxu0
        %v1973 = vadd.f32 %v435, %v1972
        %1974 = vmatmul.bf16.gmra.mxu0 %v1385
        %v1975 = vpop.f32.mrf.mxu0
        %v1976 = vadd.f32 %v435, %v1975
        %v1977 = vpop.f32.mrf.mxu0
        %v1978 = vadd.f32 %v435, %v1977
        %1979 = vmatmul.bf16.gmra.mxu0 %v1388
        %v1980 = vpop.f32.mrf.mxu0
        %v1981 = vadd.f32 %v435, %v1980
        %v1982 = vpop.f32.mrf.mxu0
        %v1983 = vadd.f32 %v435, %v1982
        %1984 = vmatmul.bf16.gmra.mxu0 %v1391
        %v1985 = vpop.f32.mrf.mxu0
        %v1986 = vadd.f32 %v435, %v1985
        %v1987 = vpop.f32.mrf.mxu0
        %v1988 = vadd.f32 %v435, %v1987
        %1989 = vmatmul.bf16.gmra.mxu0 %v1394
        %v1990 = vpop.f32.mrf.mxu0
        %v1991 = vadd.f32 %v435, %v1990
        %v1992 = vpop.f32.mrf.mxu0
        %v1993 = vadd.f32 %v435, %v1992
        %1994 = vmatmul.bf16.gmra.mxu0 %v1397
        %v1995 = vpop.f32.mrf.mxu0
        %v1996 = vadd.f32 %v435, %v1995
        %v1997 = vpop.f32.mrf.mxu0
        %v1998 = vadd.f32 %v435, %v1997
        %1999 = vmatmul.bf16.gmra.mxu0 %v1400
        %v2000 = vpop.f32.mrf.mxu0
        %v2001 = vadd.f32 %v435, %v2000
        %v2002 = vpop.f32.mrf.mxu0
        %v2003 = vadd.f32 %v435, %v2002
        %2004 = vmatmul.bf16.gmra.mxu0 %v1403
        %v2005 = vpop.f32.mrf.mxu0
        %v2006 = vadd.f32 %v435, %v2005
        %v2007 = vpop.f32.mrf.mxu0
        %v2008 = vadd.f32 %v435, %v2007
        %2009 = vmatmul.bf16.gmra.mxu0 %v1406
        %v2010 = vpop.f32.mrf.mxu0
        %v2011 = vadd.f32 %v435, %v2010
        %v2012 = vpop.f32.mrf.mxu0
        %v2013 = vadd.f32 %v435, %v2012
        %2014 = vmatmul.bf16.gmra.mxu0 %v1409
        %v2015 = vpop.f32.mrf.mxu0
        %v2016 = vadd.f32 %v435, %v2015
        %v2017 = vpop.f32.mrf.mxu0
        %v2018 = vadd.f32 %v435, %v2017
        %2019 = vmatmul.bf16.gmra.mxu0 %v1412
        %v2020 = vpop.f32.mrf.mxu0
        %v2021 = vadd.f32 %v435, %v2020
        %v2022 = vpop.f32.mrf.mxu0
        %v2023 = vadd.f32 %v435, %v2022
        %2024 = vmatmul.bf16.gmra.mxu0 %v1415
        %v2025 = vpop.f32.mrf.mxu0
        %v2026 = vadd.f32 %v435, %v2025
        %v2027 = vpop.f32.mrf.mxu0
        %v2028 = vadd.f32 %v435, %v2027
        %2029 = vmatmul.bf16.gmra.mxu0 %v1418
        %v2030 = vpop.f32.mrf.mxu0
        %v2031 = vadd.f32 %v435, %v2030
        %v2032 = vpop.f32.mrf.mxu0
        %v2033 = vadd.f32 %v435, %v2032
        %2034 = vmatmul.bf16.gmra.mxu0 %v1421
        %v2035 = vpop.f32.mrf.mxu0
        %v2036 = vadd.f32 %v435, %v2035
        %v2037 = vpop.f32.mrf.mxu0
        %v2038 = vadd.f32 %v435, %v2037
        %2039 = vmatmul.bf16.gmra.mxu0 %v1424
        %v2040 = vpop.f32.mrf.mxu0
        %v2041 = vadd.f32 %v435, %v2040
        %v2042 = vpop.f32.mrf.mxu0
        %v2043 = vadd.f32 %v435, %v2042
        %2044 = vmatmul.bf16.gmra.mxu0 %v1427
        %v2045 = vpop.f32.mrf.mxu0
        %v2046 = vadd.f32 %v435, %v2045
        %v2047 = vpop.f32.mrf.mxu0
        %v2048 = vadd.f32 %v435, %v2047
        %2049 = vmatmul.bf16.gmra.mxu0 %v1430
        %v2050 = vpop.f32.mrf.mxu0
        %v2051 = vadd.f32 %v435, %v2050
        %v2052 = vpop.f32.mrf.mxu0
        %v2053 = vadd.f32 %v435, %v2052
        %2054 = vmatmul.bf16.gmra.mxu0 %v1433
        %v2055 = vpop.f32.mrf.mxu0
        %v2056 = vadd.f32 %v435, %v2055
        %v2057 = vpop.f32.mrf.mxu0
        %v2058 = vadd.f32 %v435, %v2057
        %2059 = vmatmul.bf16.gmra.mxu0 %v1436
        %v2060 = vpop.f32.mrf.mxu0
        %v2061 = vadd.f32 %v435, %v2060
        %v2062 = vpop.f32.mrf.mxu0
        %v2063 = vadd.f32 %v435, %v2062
        %2064 = vmatmul.bf16.gmra.mxu0 %v1439
        %v2065 = vpop.f32.mrf.mxu0
        %v2066 = vadd.f32 %v435, %v2065
        %v2067 = vpop.f32.mrf.mxu0
        %v2068 = vadd.f32 %v435, %v2067
        %2069 = vmatmul.bf16.gmra.mxu0 %v1442
        %v2070 = vpop.f32.mrf.mxu0
        %v2071 = vadd.f32 %v435, %v2070
        %v2072 = vpop.f32.mrf.mxu0
        %v2073 = vadd.f32 %v435, %v2072
        %2074 = vmatmul.bf16.gmra.mxu0 %v1445
        %v2075 = vpop.f32.mrf.mxu0
        %v2076 = vadd.f32 %v435, %v2075
        %v2077 = vpop.f32.mrf.mxu0
        %v2078 = vadd.f32 %v435, %v2077
        %2079 = vmatmul.bf16.gmra.mxu0 %v1448
        %v2080 = vpop.f32.mrf.mxu0
        %v2081 = vadd.f32 %v435, %v2080
        %v2082 = vpop.f32.mrf.mxu0
        %v2083 = vadd.f32 %v435, %v2082
        %2084 = vmatmul.bf16.gmra.mxu0 %v1451
        %v2085 = vpop.f32.mrf.mxu0
        %v2086 = vadd.f32 %v435, %v2085
        %v2087 = vpop.f32.mrf.mxu0
        %v2088 = vadd.f32 %v435, %v2087
        %2089 = vmatmul.bf16.gmra.mxu0 %v1454
        %v2090 = vpop.f32.mrf.mxu0
        %v2091 = vadd.f32 %v435, %v2090
        %v2092 = vpop.f32.mrf.mxu0
        %v2093 = vadd.f32 %v435, %v2092
        %2094 = vmatmul.bf16.gmra.mxu0 %v1457
        %v2095 = vpop.f32.mrf.mxu0
        %v2096 = vadd.f32 %v435, %v2095
        %v2097 = vpop.f32.mrf.mxu0
        %v2098 = vadd.f32 %v435, %v2097
        %2099 = vmatmul.bf16.gmra.mxu0 %v1460
        %v2100 = vpop.f32.mrf.mxu0
        %v2101 = vadd.f32 %v435, %v2100
        %v2102 = vpop.f32.mrf.mxu0
        %v2103 = vadd.f32 %v435, %v2102
        %2104 = vmatmul.bf16.gmra.mxu0 %v1463
        %v2105 = vpop.f32.mrf.mxu0
        %v2106 = vadd.f32 %v435, %v2105
        %v2107 = vpop.f32.mrf.mxu0
        %v2108 = vadd.f32 %v435, %v2107
        %2109 = vmatmul.bf16.gmra.mxu0 %v1466
        %v2110 = vpop.f32.mrf.mxu0
        %v2111 = vadd.f32 %v435, %v2110
        %v2112 = vpop.f32.mrf.mxu0
        %v2113 = vadd.f32 %v435, %v2112
        %2114 = vmatmul.bf16.gmra.mxu0 %v1469
        %v2115 = vpop.f32.mrf.mxu0
        %v2116 = vadd.f32 %v435, %v2115
        %v2117 = vpop.f32.mrf.mxu0
        %v2118 = vadd.f32 %v435, %v2117
        %2119 = vmatmul.bf16.gmra.mxu0 %v1472
        %v2120 = vpop.f32.mrf.mxu0
        %v2121 = vadd.f32 %v435, %v2120
        %v2122 = vpop.f32.mrf.mxu0
        %v2123 = vadd.f32 %v435, %v2122
        %2124 = vmatmul.bf16.gmra.mxu0 %v1475
        %v2125 = vpop.f32.mrf.mxu0
        %v2126 = vadd.f32 %v435, %v2125
        %v2127 = vpop.f32.mrf.mxu0
        %v2128 = vadd.f32 %v435, %v2127
        %2129 = vdwg.mxu0
        %v2130 = vpack.c.bf16 %v1491, %v1491
        %v2131 = vpack.c.bf16 %v1493, %v1493
        %v2132 = vpack.c.bf16 %v1496, %v1496
        %v2133 = vpack.c.bf16 %v1498, %v1498
        %v2134 = vpack.c.bf16 %v1501, %v1501
        %v2135 = vpack.c.bf16 %v1503, %v1503
        %v2136 = vpack.c.bf16 %v1506, %v1506
        %v2137 = vpack.c.bf16 %v1508, %v1508
        %v2138 = vpack.c.bf16 %v1511, %v1511
        %v2139 = vpack.c.bf16 %v1513, %v1513
        %v2140 = vpack.c.bf16 %v1516, %v1516
        %v2141 = vpack.c.bf16 %v1518, %v1518
        %v2142 = vpack.c.bf16 %v1521, %v1521
        %v2143 = vpack.c.bf16 %v1523, %v1523
        %v2144 = vpack.c.bf16 %v1526, %v1526
        %v2145 = vpack.c.bf16 %v1528, %v1528
        %v2146 = vpack.c.bf16 %v1531, %v1531
        %v2147 = vpack.c.bf16 %v1533, %v1533
        %v2148 = vpack.c.bf16 %v1536, %v1536
        %v2149 = vpack.c.bf16 %v1538, %v1538
        %v2150 = vpack.c.bf16 %v1541, %v1541
        %v2151 = vpack.c.bf16 %v1543, %v1543
        %v2152 = vpack.c.bf16 %v1546, %v1546
        %v2153 = vpack.c.bf16 %v1548, %v1548
        %v2154 = vpack.c.bf16 %v1551, %v1551
        %v2155 = vpack.c.bf16 %v1553, %v1553
        %v2156 = vpack.c.bf16 %v1556, %v1556
        %v2157 = vpack.c.bf16 %v1558, %v1558
        %v2158 = vpack.c.bf16 %v1561, %v1561
        %v2159 = vpack.c.bf16 %v1563, %v1563
        %v2160 = vpack.c.bf16 %v1566, %v1566
        %v2161 = vpack.c.bf16 %v1568, %v1568
        %v2162 = vpack.c.bf16 %v1571, %v1571
        %v2163 = vpack.c.bf16 %v1573, %v1573
        %v2164 = vpack.c.bf16 %v1576, %v1576
        %v2165 = vpack.c.bf16 %v1578, %v1578
        %v2166 = vpack.c.bf16 %v1581, %v1581
        %v2167 = vpack.c.bf16 %v1583, %v1583
        %v2168 = vpack.c.bf16 %v1586, %v1586
        %v2169 = vpack.c.bf16 %v1588, %v1588
        %v2170 = vpack.c.bf16 %v1591, %v1591
        %v2171 = vpack.c.bf16 %v1593, %v1593
        %v2172 = vpack.c.bf16 %v1596, %v1596
        %v2173 = vpack.c.bf16 %v1598, %v1598
        %v2174 = vpack.c.bf16 %v1601, %v1601
        %v2175 = vpack.c.bf16 %v1603, %v1603
        %v2176 = vpack.c.bf16 %v1606, %v1606
        %v2177 = vpack.c.bf16 %v1608, %v1608
        %v2178 = vpack.c.bf16 %v1611, %v1611
        %v2179 = vpack.c.bf16 %v1613, %v1613
        %v2180 = vpack.c.bf16 %v1616, %v1616
        %v2181 = vpack.c.bf16 %v1618, %v1618
        %v2182 = vpack.c.bf16 %v1621, %v1621
        %v2183 = vpack.c.bf16 %v1623, %v1623
        %v2184 = vpack.c.bf16 %v1626, %v1626
        %v2185 = vpack.c.bf16 %v1628, %v1628
        %v2186 = vpack.c.bf16 %v1631, %v1631
        %v2187 = vpack.c.bf16 %v1633, %v1633
        %v2188 = vpack.c.bf16 %v1636, %v1636
        %v2189 = vpack.c.bf16 %v1638, %v1638
        %v2190 = vpack.c.bf16 %v1641, %v1641
        %v2191 = vpack.c.bf16 %v1643, %v1643
        %v2192 = vpack.c.bf16 %v1646, %v1646
        %v2193 = vpack.c.bf16 %v1648, %v1648
        %v2194 = vpack.c.bf16 %v1651, %v1651
        %v2195 = vpack.c.bf16 %v1653, %v1653
        %v2196 = vpack.c.bf16 %v1656, %v1656
        %v2197 = vpack.c.bf16 %v1658, %v1658
        %v2198 = vpack.c.bf16 %v1661, %v1661
        %v2199 = vpack.c.bf16 %v1663, %v1663
        %v2200 = vpack.c.bf16 %v1666, %v1666
        %v2201 = vpack.c.bf16 %v1668, %v1668
        %v2202 = vpack.c.bf16 %v1671, %v1671
        %v2203 = vpack.c.bf16 %v1673, %v1673
        %v2204 = vpack.c.bf16 %v1676, %v1676
        %v2205 = vpack.c.bf16 %v1678, %v1678
        %v2206 = vpack.c.bf16 %v1681, %v1681
        %v2207 = vpack.c.bf16 %v1683, %v1683
        %v2208 = vpack.c.bf16 %v1686, %v1686
        %v2209 = vpack.c.bf16 %v1688, %v1688
        %v2210 = vpack.c.bf16 %v1691, %v1691
        %v2211 = vpack.c.bf16 %v1693, %v1693
        %v2212 = vpack.c.bf16 %v1696, %v1696
        %v2213 = vpack.c.bf16 %v1698, %v1698
        %v2214 = vpack.c.bf16 %v1701, %v1701
        %v2215 = vpack.c.bf16 %v1703, %v1703
        %v2216 = vpack.c.bf16 %v1706, %v1706
        %v2217 = vpack.c.bf16 %v1708, %v1708
        %v2218 = vpack.c.bf16 %v1711, %v1711
        %v2219 = vpack.c.bf16 %v1713, %v1713
        %v2220 = vpack.c.bf16 %v1716, %v1716
        %v2221 = vpack.c.bf16 %v1718, %v1718
        %v2222 = vpack.c.bf16 %v1721, %v1721
        %v2223 = vpack.c.bf16 %v1723, %v1723
        %v2224 = vpack.c.bf16 %v1726, %v1726
        %v2225 = vpack.c.bf16 %v1728, %v1728
        %v2226 = vpack.c.bf16 %v1731, %v1731
        %v2227 = vpack.c.bf16 %v1733, %v1733
        %v2228 = vpack.c.bf16 %v1736, %v1736
        %v2229 = vpack.c.bf16 %v1738, %v1738
        %v2230 = vpack.c.bf16 %v1741, %v1741
        %v2231 = vpack.c.bf16 %v1743, %v1743
        %v2232 = vpack.c.bf16 %v1746, %v1746
        %v2233 = vpack.c.bf16 %v1748, %v1748
        %v2234 = vpack.c.bf16 %v1751, %v1751
        %v2235 = vpack.c.bf16 %v1753, %v1753
        %v2236 = vpack.c.bf16 %v1756, %v1756
        %v2237 = vpack.c.bf16 %v1758, %v1758
        %v2238 = vpack.c.bf16 %v1761, %v1761
        %v2239 = vpack.c.bf16 %v1763, %v1763
        %v2240 = vpack.c.bf16 %v1766, %v1766
        %v2241 = vpack.c.bf16 %v1768, %v1768
        %v2242 = vpack.c.bf16 %v1771, %v1771
        %v2243 = vpack.c.bf16 %v1773, %v1773
        %v2244 = vpack.c.bf16 %v1776, %v1776
        %v2245 = vpack.c.bf16 %v1778, %v1778
        %v2246 = vpack.c.bf16 %v1781, %v1781
        %v2247 = vpack.c.bf16 %v1783, %v1783
        %v2248 = vpack.c.bf16 %v1786, %v1786
        %v2249 = vpack.c.bf16 %v1788, %v1788
        %v2250 = vpack.c.bf16 %v1791, %v1791
        %v2251 = vpack.c.bf16 %v1793, %v1793
        %v2252 = vpack.c.bf16 %v1796, %v1796
        %v2253 = vpack.c.bf16 %v1798, %v1798
        %v2254 = vpack.c.bf16 %v1801, %v1801
        %v2255 = vpack.c.bf16 %v1803, %v1803
        %v2256 = vpack.c.bf16 %v1806, %v1806
        %v2257 = vpack.c.bf16 %v1808, %v1808
        %v2258 = vpack.c.bf16 %v1811, %v1811
        %v2259 = vpack.c.bf16 %v1813, %v1813
        %v2260 = vpack.c.bf16 %v1816, %v1816
        %v2261 = vpack.c.bf16 %v1818, %v1818
        %v2262 = vpack.c.bf16 %v1821, %v1821
        %v2263 = vpack.c.bf16 %v1823, %v1823
        %v2264 = vpack.c.bf16 %v1826, %v1826
        %v2265 = vpack.c.bf16 %v1828, %v1828
        %v2266 = vpack.c.bf16 %v1831, %v1831
        %v2267 = vpack.c.bf16 %v1833, %v1833
        %v2268 = vpack.c.bf16 %v1836, %v1836
        %v2269 = vpack.c.bf16 %v1838, %v1838
        %v2270 = vpack.c.bf16 %v1841, %v1841
        %v2271 = vpack.c.bf16 %v1843, %v1843
        %v2272 = vpack.c.bf16 %v1846, %v1846
        %v2273 = vpack.c.bf16 %v1848, %v1848
        %v2274 = vpack.c.bf16 %v1851, %v1851
        %v2275 = vpack.c.bf16 %v1853, %v1853
        %v2276 = vpack.c.bf16 %v1856, %v1856
        %v2277 = vpack.c.bf16 %v1858, %v1858
        %v2278 = vpack.c.bf16 %v1861, %v1861
        %v2279 = vpack.c.bf16 %v1863, %v1863
        %v2280 = vpack.c.bf16 %v1866, %v1866
        %v2281 = vpack.c.bf16 %v1868, %v1868
        %v2282 = vpack.c.bf16 %v1871, %v1871
        %v2283 = vpack.c.bf16 %v1873, %v1873
        %v2284 = vpack.c.bf16 %v1876, %v1876
        %v2285 = vpack.c.bf16 %v1878, %v1878
        %v2286 = vpack.c.bf16 %v1881, %v1881
        %v2287 = vpack.c.bf16 %v1883, %v1883
        %v2288 = vpack.c.bf16 %v1886, %v1886
        %v2289 = vpack.c.bf16 %v1888, %v1888
        %v2290 = vpack.c.bf16 %v1891, %v1891
        %v2291 = vpack.c.bf16 %v1893, %v1893
        %v2292 = vpack.c.bf16 %v1896, %v1896
        %v2293 = vpack.c.bf16 %v1898, %v1898
        %v2294 = vpack.c.bf16 %v1901, %v1901
        %v2295 = vpack.c.bf16 %v1903, %v1903
        %v2296 = vpack.c.bf16 %v1906, %v1906
        %v2297 = vpack.c.bf16 %v1908, %v1908
        %v2298 = vpack.c.bf16 %v1911, %v1911
        %v2299 = vpack.c.bf16 %v1913, %v1913
        %v2300 = vpack.c.bf16 %v1916, %v1916
        %v2301 = vpack.c.bf16 %v1918, %v1918
        %v2302 = vpack.c.bf16 %v1921, %v1921
        %v2303 = vpack.c.bf16 %v1923, %v1923
        %v2304 = vpack.c.bf16 %v1926, %v1926
        %v2305 = vpack.c.bf16 %v1928, %v1928
        %v2306 = vpack.c.bf16 %v1931, %v1931
        %v2307 = vpack.c.bf16 %v1933, %v1933
        %v2308 = vpack.c.bf16 %v1936, %v1936
        %v2309 = vpack.c.bf16 %v1938, %v1938
        %v2310 = vpack.c.bf16 %v1941, %v1941
        %v2311 = vpack.c.bf16 %v1943, %v1943
        %v2312 = vpack.c.bf16 %v1946, %v1946
        %v2313 = vpack.c.bf16 %v1948, %v1948
        %v2314 = vpack.c.bf16 %v1951, %v1951
        %v2315 = vpack.c.bf16 %v1953, %v1953
        %v2316 = vpack.c.bf16 %v1956, %v1956
        %v2317 = vpack.c.bf16 %v1958, %v1958
        %v2318 = vpack.c.bf16 %v1961, %v1961
        %v2319 = vpack.c.bf16 %v1963, %v1963
        %v2320 = vpack.c.bf16 %v1966, %v1966
        %v2321 = vpack.c.bf16 %v1968, %v1968
        %v2322 = vpack.c.bf16 %v1971, %v1971
        %v2323 = vpack.c.bf16 %v1973, %v1973
        %v2324 = vpack.c.bf16 %v1976, %v1976
        %v2325 = vpack.c.bf16 %v1978, %v1978
        %v2326 = vpack.c.bf16 %v1981, %v1981
        %v2327 = vpack.c.bf16 %v1983, %v1983
        %v2328 = vpack.c.bf16 %v1986, %v1986
        %v2329 = vpack.c.bf16 %v1988, %v1988
        %v2330 = vpack.c.bf16 %v1991, %v1991
        %v2331 = vpack.c.bf16 %v1993, %v1993
        %v2332 = vpack.c.bf16 %v1996, %v1996
        %v2333 = vpack.c.bf16 %v1998, %v1998
        %v2334 = vpack.c.bf16 %v2001, %v2001
        %v2335 = vpack.c.bf16 %v2003, %v2003
        %v2336 = vpack.c.bf16 %v2006, %v2006
        %v2337 = vpack.c.bf16 %v2008, %v2008
        %v2338 = vpack.c.bf16 %v2011, %v2011
        %v2339 = vpack.c.bf16 %v2013, %v2013
        %v2340 = vpack.c.bf16 %v2016, %v2016
        %v2341 = vpack.c.bf16 %v2018, %v2018
        %v2342 = vpack.c.bf16 %v2021, %v2021
        %v2343 = vpack.c.bf16 %v2023, %v2023
        %v2344 = vpack.c.bf16 %v2026, %v2026
        %v2345 = vpack.c.bf16 %v2028, %v2028
        %v2346 = vpack.c.bf16 %v2031, %v2031
        %v2347 = vpack.c.bf16 %v2033, %v2033
        %v2348 = vpack.c.bf16 %v2036, %v2036
        %v2349 = vpack.c.bf16 %v2038, %v2038
        %v2350 = vpack.c.bf16 %v2041, %v2041
        %v2351 = vpack.c.bf16 %v2043, %v2043
        %v2352 = vpack.c.bf16 %v2046, %v2046
        %v2353 = vpack.c.bf16 %v2048, %v2048
        %v2354 = vpack.c.bf16 %v2051, %v2051
        %v2355 = vpack.c.bf16 %v2053, %v2053
        %v2356 = vpack.c.bf16 %v2056, %v2056
        %v2357 = vpack.c.bf16 %v2058, %v2058
        %v2358 = vpack.c.bf16 %v2061, %v2061
        %v2359 = vpack.c.bf16 %v2063, %v2063
        %v2360 = vpack.c.bf16 %v2066, %v2066
        %v2361 = vpack.c.bf16 %v2068, %v2068
        %v2362 = vpack.c.bf16 %v2071, %v2071
        %v2363 = vpack.c.bf16 %v2073, %v2073
        %v2364 = vpack.c.bf16 %v2076, %v2076
        %v2365 = vpack.c.bf16 %v2078, %v2078
        %v2366 = vpack.c.bf16 %v2081, %v2081
        %v2367 = vpack.c.bf16 %v2083, %v2083
        %v2368 = vpack.c.bf16 %v2086, %v2086
        %v2369 = vpack.c.bf16 %v2088, %v2088
        %v2370 = vpack.c.bf16 %v2091, %v2091
        %v2371 = vpack.c.bf16 %v2093, %v2093
        %v2372 = vpack.c.bf16 %v2096, %v2096
        %v2373 = vpack.c.bf16 %v2098, %v2098
        %v2374 = vpack.c.bf16 %v2101, %v2101
        %v2375 = vpack.c.bf16 %v2103, %v2103
        %v2376 = vpack.c.bf16 %v2106, %v2106
        %v2377 = vpack.c.bf16 %v2108, %v2108
        %v2378 = vpack.c.bf16 %v2111, %v2111
        %v2379 = vpack.c.bf16 %v2113, %v2113
        %v2380 = vpack.c.bf16 %v2116, %v2116
        %v2381 = vpack.c.bf16 %v2118, %v2118
        %v2382 = vpack.c.bf16 %v2121, %v2121
        %v2383 = vpack.c.bf16 %v2123, %v2123
        %v2384 = vpack.c.bf16 %v2126, %v2126
        %v2385 = vpack.c.bf16 %v2128, %v2128
        %2386 = vst [vmem:[%s164] sm:$0xf] %v2130
        %2387 = vst [vmem:[%s164 + $0x4] sm:$0xf] %v2131
        %2388 = vst [vmem:[%s164 + $0x8] sm:$0xf] %v2132
        %2389 = vst [vmem:[%s164 + $0xc] sm:$0xf] %v2133
        %2390 = vst [vmem:[%s164 + $0x10] sm:$0xf] %v2134
        %2391 = vst [vmem:[%s164 + $0x14] sm:$0xf] %v2135
        %2392 = vst [vmem:[%s164 + $0x18] sm:$0xf] %v2136
        %2393 = vst [vmem:[%s164 + $0x1c] sm:$0xf] %v2137
        %2394 = vst [vmem:[%s164 + $0x20] sm:$0xf] %v2138
        %2395 = vst [vmem:[%s164 + $0x24] sm:$0xf] %v2139
        %2396 = vst [vmem:[%s164 + $0x28] sm:$0xf] %v2140
        %2397 = vst [vmem:[%s164 + $0x2c] sm:$0xf] %v2141
        %2398 = vst [vmem:[%s164 + $0x30] sm:$0xf] %v2142
        %2399 = vst [vmem:[%s164 + $0x34] sm:$0xf] %v2143
        %2400 = vst [vmem:[%s164 + $0x38] sm:$0xf] %v2144
        %2401 = vst [vmem:[%s164 + $0x3c] sm:$0xf] %v2145
        %2402 = vst [vmem:[%s164 + $0x40] sm:$0xf] %v2146
        %2403 = vst [vmem:[%s164 + $0x44] sm:$0xf] %v2147
        %2404 = vst [vmem:[%s164 + $0x48] sm:$0xf] %v2148
        %2405 = vst [vmem:[%s164 + $0x4c] sm:$0xf] %v2149
        %2406 = vst [vmem:[%s164 + $0x50] sm:$0xf] %v2150
        %2407 = vst [vmem:[%s164 + $0x54] sm:$0xf] %v2151
        %2408 = vst [vmem:[%s164 + $0x58] sm:$0xf] %v2152
        %2409 = vst [vmem:[%s164 + $0x5c] sm:$0xf] %v2153
        %2410 = vst [vmem:[%s164 + $0x60] sm:$0xf] %v2154
        %2411 = vst [vmem:[%s164 + $0x64] sm:$0xf] %v2155
        %2412 = vst [vmem:[%s164 + $0x68] sm:$0xf] %v2156
        %2413 = vst [vmem:[%s164 + $0x6c] sm:$0xf] %v2157
        %2414 = vst [vmem:[%s164 + $0x70] sm:$0xf] %v2158
        %2415 = vst [vmem:[%s164 + $0x74] sm:$0xf] %v2159
        %2416 = vst [vmem:[%s164 + $0x78] sm:$0xf] %v2160
        %2417 = vst [vmem:[%s164 + $0x7c] sm:$0xf] %v2161
        %2418 = vst [vmem:[%s164 + $0x80] sm:$0xf] %v2162
        %2419 = vst [vmem:[%s164 + $0x84] sm:$0xf] %v2163
        %2420 = vst [vmem:[%s164 + $0x88] sm:$0xf] %v2164
        %2421 = vst [vmem:[%s164 + $0x8c] sm:$0xf] %v2165
        %2422 = vst [vmem:[%s164 + $0x90] sm:$0xf] %v2166
        %2423 = vst [vmem:[%s164 + $0x94] sm:$0xf] %v2167
        %2424 = vst [vmem:[%s164 + $0x98] sm:$0xf] %v2168
        %2425 = vst [vmem:[%s164 + $0x9c] sm:$0xf] %v2169
        %2426 = vst [vmem:[%s164 + $0xa0] sm:$0xf] %v2170
        %2427 = vst [vmem:[%s164 + $0xa4] sm:$0xf] %v2171
        %2428 = vst [vmem:[%s164 + $0xa8] sm:$0xf] %v2172
        %2429 = vst [vmem:[%s164 + $0xac] sm:$0xf] %v2173
        %2430 = vst [vmem:[%s164 + $0xb0] sm:$0xf] %v2174
        %2431 = vst [vmem:[%s164 + $0xb4] sm:$0xf] %v2175
        %2432 = vst [vmem:[%s164 + $0xb8] sm:$0xf] %v2176
        %2433 = vst [vmem:[%s164 + $0xbc] sm:$0xf] %v2177
        %2434 = vst [vmem:[%s164 + $0xc0] sm:$0xf] %v2178
        %2435 = vst [vmem:[%s164 + $0xc4] sm:$0xf] %v2179
        %2436 = vst [vmem:[%s164 + $0xc8] sm:$0xf] %v2180
        %2437 = vst [vmem:[%s164 + $0xcc] sm:$0xf] %v2181
        %2438 = vst [vmem:[%s164 + $0xd0] sm:$0xf] %v2182
        %2439 = vst [vmem:[%s164 + $0xd4] sm:$0xf] %v2183
        %2440 = vst [vmem:[%s164 + $0xd8] sm:$0xf] %v2184
        %2441 = vst [vmem:[%s164 + $0xdc] sm:$0xf] %v2185
        %2442 = vst [vmem:[%s164 + $0xe0] sm:$0xf] %v2186
        %2443 = vst [vmem:[%s164 + $0xe4] sm:$0xf] %v2187
        %2444 = vst [vmem:[%s164 + $0xe8] sm:$0xf] %v2188
        %2445 = vst [vmem:[%s164 + $0xec] sm:$0xf] %v2189
        %2446 = vst [vmem:[%s164 + $0xf0] sm:$0xf] %v2190
        %2447 = vst [vmem:[%s164 + $0xf4] sm:$0xf] %v2191
        %2448 = vst [vmem:[%s164 + $0xf8] sm:$0xf] %v2192
        %2449 = vst [vmem:[%s164 + $0xfc] sm:$0xf] %v2193
        %2450 = vst [vmem:[%s164 + $0x100] sm:$0xf] %v2194
        %2451 = vst [vmem:[%s164 + $0x104] sm:$0xf] %v2195
        %2452 = vst [vmem:[%s164 + $0x108] sm:$0xf] %v2196
        %2453 = vst [vmem:[%s164 + $0x10c] sm:$0xf] %v2197
        %2454 = vst [vmem:[%s164 + $0x110] sm:$0xf] %v2198
        %2455 = vst [vmem:[%s164 + $0x114] sm:$0xf] %v2199
        %2456 = vst [vmem:[%s164 + $0x118] sm:$0xf] %v2200
        %2457 = vst [vmem:[%s164 + $0x11c] sm:$0xf] %v2201
        %2458 = vst [vmem:[%s164 + $0x120] sm:$0xf] %v2202
        %2459 = vst [vmem:[%s164 + $0x124] sm:$0xf] %v2203
        %2460 = vst [vmem:[%s164 + $0x128] sm:$0xf] %v2204
        %2461 = vst [vmem:[%s164 + $0x12c] sm:$0xf] %v2205
        %2462 = vst [vmem:[%s164 + $0x130] sm:$0xf] %v2206
        %2463 = vst [vmem:[%s164 + $0x134] sm:$0xf] %v2207
        %2464 = vst [vmem:[%s164 + $0x138] sm:$0xf] %v2208
        %2465 = vst [vmem:[%s164 + $0x13c] sm:$0xf] %v2209
        %2466 = vst [vmem:[%s164 + $0x140] sm:$0xf] %v2210
        %2467 = vst [vmem:[%s164 + $0x144] sm:$0xf] %v2211
        %2468 = vst [vmem:[%s164 + $0x148] sm:$0xf] %v2212
        %2469 = vst [vmem:[%s164 + $0x14c] sm:$0xf] %v2213
        %2470 = vst [vmem:[%s164 + $0x150] sm:$0xf] %v2214
        %2471 = vst [vmem:[%s164 + $0x154] sm:$0xf] %v2215
        %2472 = vst [vmem:[%s164 + $0x158] sm:$0xf] %v2216
        %2473 = vst [vmem:[%s164 + $0x15c] sm:$0xf] %v2217
        %2474 = vst [vmem:[%s164 + $0x160] sm:$0xf] %v2218
        %2475 = vst [vmem:[%s164 + $0x164] sm:$0xf] %v2219
        %2476 = vst [vmem:[%s164 + $0x168] sm:$0xf] %v2220
        %2477 = vst [vmem:[%s164 + $0x16c] sm:$0xf] %v2221
        %2478 = vst [vmem:[%s164 + $0x170] sm:$0xf] %v2222
        %2479 = vst [vmem:[%s164 + $0x174] sm:$0xf] %v2223
        %2480 = vst [vmem:[%s164 + $0x178] sm:$0xf] %v2224
        %2481 = vst [vmem:[%s164 + $0x17c] sm:$0xf] %v2225
        %2482 = vst [vmem:[%s164 + $0x180] sm:$0xf] %v2226
        %2483 = vst [vmem:[%s164 + $0x184] sm:$0xf] %v2227
        %2484 = vst [vmem:[%s164 + $0x188] sm:$0xf] %v2228
        %2485 = vst [vmem:[%s164 + $0x18c] sm:$0xf] %v2229
        %2486 = vst [vmem:[%s164 + $0x190] sm:$0xf] %v2230
        %2487 = vst [vmem:[%s164 + $0x194] sm:$0xf] %v2231
        %2488 = vst [vmem:[%s164 + $0x198] sm:$0xf] %v2232
        %2489 = vst [vmem:[%s164 + $0x19c] sm:$0xf] %v2233
        %2490 = vst [vmem:[%s164 + $0x1a0] sm:$0xf] %v2234
        %2491 = vst [vmem:[%s164 + $0x1a4] sm:$0xf] %v2235
        %2492 = vst [vmem:[%s164 + $0x1a8] sm:$0xf] %v2236
        %2493 = vst [vmem:[%s164 + $0x1ac] sm:$0xf] %v2237
        %2494 = vst [vmem:[%s164 + $0x1b0] sm:$0xf] %v2238
        %2495 = vst [vmem:[%s164 + $0x1b4] sm:$0xf] %v2239
        %2496 = vst [vmem:[%s164 + $0x1b8] sm:$0xf] %v2240
        %2497 = vst [vmem:[%s164 + $0x1bc] sm:$0xf] %v2241
        %2498 = vst [vmem:[%s164 + $0x1c0] sm:$0xf] %v2242
        %2499 = vst [vmem:[%s164 + $0x1c4] sm:$0xf] %v2243
        %2500 = vst [vmem:[%s164 + $0x1c8] sm:$0xf] %v2244
        %2501 = vst [vmem:[%s164 + $0x1cc] sm:$0xf] %v2245
        %2502 = vst [vmem:[%s164 + $0x1d0] sm:$0xf] %v2246
        %2503 = vst [vmem:[%s164 + $0x1d4] sm:$0xf] %v2247
        %2504 = vst [vmem:[%s164 + $0x1d8] sm:$0xf] %v2248
        %2505 = vst [vmem:[%s164 + $0x1dc] sm:$0xf] %v2249
        %2506 = vst [vmem:[%s164 + $0x1e0] sm:$0xf] %v2250
        %2507 = vst [vmem:[%s164 + $0x1e4] sm:$0xf] %v2251
        %2508 = vst [vmem:[%s164 + $0x1e8] sm:$0xf] %v2252
        %2509 = vst [vmem:[%s164 + $0x1ec] sm:$0xf] %v2253
        %2510 = vst [vmem:[%s164 + $0x1f0] sm:$0xf] %v2254
        %2511 = vst [vmem:[%s164 + $0x1f4] sm:$0xf] %v2255
        %2512 = vst [vmem:[%s164 + $0x1f8] sm:$0xf] %v2256
        %2513 = vst [vmem:[%s164 + $0x1fc] sm:$0xf] %v2257
        %2514 = vst [vmem:[%s164 + $0x200] sm:$0xf] %v2258
        %2515 = vst [vmem:[%s164 + $0x204] sm:$0xf] %v2259
        %2516 = vst [vmem:[%s164 + $0x208] sm:$0xf] %v2260
        %2517 = vst [vmem:[%s164 + $0x20c] sm:$0xf] %v2261
        %2518 = vst [vmem:[%s164 + $0x210] sm:$0xf] %v2262
        %2519 = vst [vmem:[%s164 + $0x214] sm:$0xf] %v2263
        %2520 = vst [vmem:[%s164 + $0x218] sm:$0xf] %v2264
        %2521 = vst [vmem:[%s164 + $0x21c] sm:$0xf] %v2265
        %2522 = vst [vmem:[%s164 + $0x220] sm:$0xf] %v2266
        %2523 = vst [vmem:[%s164 + $0x224] sm:$0xf] %v2267
        %2524 = vst [vmem:[%s164 + $0x228] sm:$0xf] %v2268
        %2525 = vst [vmem:[%s164 + $0x22c] sm:$0xf] %v2269
        %2526 = vst [vmem:[%s164 + $0x230] sm:$0xf] %v2270
        %2527 = vst [vmem:[%s164 + $0x234] sm:$0xf] %v2271
        %2528 = vst [vmem:[%s164 + $0x238] sm:$0xf] %v2272
        %2529 = vst [vmem:[%s164 + $0x23c] sm:$0xf] %v2273
        %2530 = vst [vmem:[%s164 + $0x240] sm:$0xf] %v2274
        %2531 = vst [vmem:[%s164 + $0x244] sm:$0xf] %v2275
        %2532 = vst [vmem:[%s164 + $0x248] sm:$0xf] %v2276
        %2533 = vst [vmem:[%s164 + $0x24c] sm:$0xf] %v2277
        %2534 = vst [vmem:[%s164 + $0x250] sm:$0xf] %v2278
        %2535 = vst [vmem:[%s164 + $0x254] sm:$0xf] %v2279
        %2536 = vst [vmem:[%s164 + $0x258] sm:$0xf] %v2280
        %2537 = vst [vmem:[%s164 + $0x25c] sm:$0xf] %v2281
        %2538 = vst [vmem:[%s164 + $0x260] sm:$0xf] %v2282
        %2539 = vst [vmem:[%s164 + $0x264] sm:$0xf] %v2283
        %2540 = vst [vmem:[%s164 + $0x268] sm:$0xf] %v2284
        %2541 = vst [vmem:[%s164 + $0x26c] sm:$0xf] %v2285
        %2542 = vst [vmem:[%s164 + $0x270] sm:$0xf] %v2286
        %2543 = vst [vmem:[%s164 + $0x274] sm:$0xf] %v2287
        %2544 = vst [vmem:[%s164 + $0x278] sm:$0xf] %v2288
        %2545 = vst [vmem:[%s164 + $0x27c] sm:$0xf] %v2289
        %2546 = vst [vmem:[%s164 + $0x280] sm:$0xf] %v2290
        %2547 = vst [vmem:[%s164 + $0x284] sm:$0xf] %v2291
        %2548 = vst [vmem:[%s164 + $0x288] sm:$0xf] %v2292
        %2549 = vst [vmem:[%s164 + $0x28c] sm:$0xf] %v2293
        %2550 = vst [vmem:[%s164 + $0x290] sm:$0xf] %v2294
        %2551 = vst [vmem:[%s164 + $0x294] sm:$0xf] %v2295
        %2552 = vst [vmem:[%s164 + $0x298] sm:$0xf] %v2296
        %2553 = vst [vmem:[%s164 + $0x29c] sm:$0xf] %v2297
        %2554 = vst [vmem:[%s164 + $0x2a0] sm:$0xf] %v2298
        %2555 = vst [vmem:[%s164 + $0x2a4] sm:$0xf] %v2299
        %2556 = vst [vmem:[%s164 + $0x2a8] sm:$0xf] %v2300
        %2557 = vst [vmem:[%s164 + $0x2ac] sm:$0xf] %v2301
        %2558 = vst [vmem:[%s164 + $0x2b0] sm:$0xf] %v2302
        %2559 = vst [vmem:[%s164 + $0x2b4] sm:$0xf] %v2303
        %2560 = vst [vmem:[%s164 + $0x2b8] sm:$0xf] %v2304
        %2561 = vst [vmem:[%s164 + $0x2bc] sm:$0xf] %v2305
        %2562 = vst [vmem:[%s164 + $0x2c0] sm:$0xf] %v2306
        %2563 = vst [vmem:[%s164 + $0x2c4] sm:$0xf] %v2307
        %2564 = vst [vmem:[%s164 + $0x2c8] sm:$0xf] %v2308
        %2565 = vst [vmem:[%s164 + $0x2cc] sm:$0xf] %v2309
        %2566 = vst [vmem:[%s164 + $0x2d0] sm:$0xf] %v2310
        %2567 = vst [vmem:[%s164 + $0x2d4] sm:$0xf] %v2311
        %2568 = vst [vmem:[%s164 + $0x2d8] sm:$0xf] %v2312
        %2569 = vst [vmem:[%s164 + $0x2dc] sm:$0xf] %v2313
        %2570 = vst [vmem:[%s164 + $0x2e0] sm:$0xf] %v2314
        %2571 = vst [vmem:[%s164 + $0x2e4] sm:$0xf] %v2315
        %2572 = vst [vmem:[%s164 + $0x2e8] sm:$0xf] %v2316
        %2573 = vst [vmem:[%s164 + $0x2ec] sm:$0xf] %v2317
        %2574 = vst [vmem:[%s164 + $0x2f0] sm:$0xf] %v2318
        %2575 = vst [vmem:[%s164 + $0x2f4] sm:$0xf] %v2319
        %2576 = vst [vmem:[%s164 + $0x2f8] sm:$0xf] %v2320
        %2577 = vst [vmem:[%s164 + $0x2fc] sm:$0xf] %v2321
        %2578 = vst [vmem:[%s164 + $0x300] sm:$0xf] %v2322
        %2579 = vst [vmem:[%s164 + $0x304] sm:$0xf] %v2323
        %2580 = vst [vmem:[%s164 + $0x308] sm:$0xf] %v2324
        %2581 = vst [vmem:[%s164 + $0x30c] sm:$0xf] %v2325
        %2582 = vst [vmem:[%s164 + $0x310] sm:$0xf] %v2326
        %2583 = vst [vmem:[%s164 + $0x314] sm:$0xf] %v2327
        %2584 = vst [vmem:[%s164 + $0x318] sm:$0xf] %v2328
        %2585 = vst [vmem:[%s164 + $0x31c] sm:$0xf] %v2329
        %2586 = vst [vmem:[%s164 + $0x320] sm:$0xf] %v2330
        %2587 = vst [vmem:[%s164 + $0x324] sm:$0xf] %v2331
        %2588 = vst [vmem:[%s164 + $0x328] sm:$0xf] %v2332
        %2589 = vst [vmem:[%s164 + $0x32c] sm:$0xf] %v2333
        %2590 = vst [vmem:[%s164 + $0x330] sm:$0xf] %v2334
        %2591 = vst [vmem:[%s164 + $0x334] sm:$0xf] %v2335
        %2592 = vst [vmem:[%s164 + $0x338] sm:$0xf] %v2336
        %2593 = vst [vmem:[%s164 + $0x33c] sm:$0xf] %v2337
        %2594 = vst [vmem:[%s164 + $0x340] sm:$0xf] %v2338
        %2595 = vst [vmem:[%s164 + $0x344] sm:$0xf] %v2339
        %2596 = vst [vmem:[%s164 + $0x348] sm:$0xf] %v2340
        %2597 = vst [vmem:[%s164 + $0x34c] sm:$0xf] %v2341
        %2598 = vst [vmem:[%s164 + $0x350] sm:$0xf] %v2342
        %2599 = vst [vmem:[%s164 + $0x354] sm:$0xf] %v2343
        %2600 = vst [vmem:[%s164 + $0x358] sm:$0xf] %v2344
        %2601 = vst [vmem:[%s164 + $0x35c] sm:$0xf] %v2345
        %2602 = vst [vmem:[%s164 + $0x360] sm:$0xf] %v2346
        %2603 = vst [vmem:[%s164 + $0x364] sm:$0xf] %v2347
        %2604 = vst [vmem:[%s164 + $0x368] sm:$0xf] %v2348
        %2605 = vst [vmem:[%s164 + $0x36c] sm:$0xf] %v2349
        %2606 = vst [vmem:[%s164 + $0x370] sm:$0xf] %v2350
        %2607 = vst [vmem:[%s164 + $0x374] sm:$0xf] %v2351
        %2608 = vst [vmem:[%s164 + $0x378] sm:$0xf] %v2352
        %2609 = vst [vmem:[%s164 + $0x37c] sm:$0xf] %v2353
        %2610 = vst [vmem:[%s164 + $0x380] sm:$0xf] %v2354
        %2611 = vst [vmem:[%s164 + $0x384] sm:$0xf] %v2355
        %2612 = vst [vmem:[%s164 + $0x388] sm:$0xf] %v2356
        %2613 = vst [vmem:[%s164 + $0x38c] sm:$0xf] %v2357
        %2614 = vst [vmem:[%s164 + $0x390] sm:$0xf] %v2358
        %2615 = vst [vmem:[%s164 + $0x394] sm:$0xf] %v2359
        %2616 = vst [vmem:[%s164 + $0x398] sm:$0xf] %v2360
        %2617 = vst [vmem:[%s164 + $0x39c] sm:$0xf] %v2361
        %2618 = vst [vmem:[%s164 + $0x3a0] sm:$0xf] %v2362
        %2619 = vst [vmem:[%s164 + $0x3a4] sm:$0xf] %v2363
        %2620 = vst [vmem:[%s164 + $0x3a8] sm:$0xf] %v2364
        %2621 = vst [vmem:[%s164 + $0x3ac] sm:$0xf] %v2365
        %2622 = vst [vmem:[%s164 + $0x3b0] sm:$0xf] %v2366
        %2623 = vst [vmem:[%s164 + $0x3b4] sm:$0xf] %v2367
        %2624 = vst [vmem:[%s164 + $0x3b8] sm:$0xf] %v2368
        %2625 = vst [vmem:[%s164 + $0x3bc] sm:$0xf] %v2369
        %2626 = vst [vmem:[%s164 + $0x3c0] sm:$0xf] %v2370
        %2627 = vst [vmem:[%s164 + $0x3c4] sm:$0xf] %v2371
        %2628 = vst [vmem:[%s164 + $0x3c8] sm:$0xf] %v2372
        %2629 = vst [vmem:[%s164 + $0x3cc] sm:$0xf] %v2373
        %2630 = vst [vmem:[%s164 + $0x3d0] sm:$0xf] %v2374
        %2631 = vst [vmem:[%s164 + $0x3d4] sm:$0xf] %v2375
        %2632 = vst [vmem:[%s164 + $0x3d8] sm:$0xf] %v2376
        %2633 = vst [vmem:[%s164 + $0x3dc] sm:$0xf] %v2377
        %2634 = vst [vmem:[%s164 + $0x3e0] sm:$0xf] %v2378
        %2635 = vst [vmem:[%s164 + $0x3e4] sm:$0xf] %v2379
        %2636 = vst [vmem:[%s164 + $0x3e8] sm:$0xf] %v2380
        %2637 = vst [vmem:[%s164 + $0x3ec] sm:$0xf] %v2381
        %2638 = vst [vmem:[%s164 + $0x3f0] sm:$0xf] %v2382
        %2639 = vst [vmem:[%s164 + $0x3f4] sm:$0xf] %v2383
        %2640 = vst [vmem:[%s164 + $0x3f8] sm:$0xf] %v2384
        %2641 = vst [vmem:[%s164 + $0x3fc] sm:$0xf] %v2385
        %s2642 = sand.u32 %s93, 1
        %s2643 = scalar_lea.sflag [#allocation3], %s2642
        %s2644 = sand.u32 %s93, 1
        %s2645 = smul.addr %s2644, 1024
        %s2646 = scalar_lea.vmem [#allocation2], %s2645
        // Predicated region
        $region33: #{tpu_custom_call.1} parent=31 // pred_check
          %p2647 = pneg %p103
        $region34: #{tpu_custom_call.1} parent=31 // pred_check_branch
          %2649 = sbr.rel (%p2647) target = $region36
        $region35: #{tpu_custom_call.1} parent=31 // pred_region
          %2651 = vsyncadd %s2643, 0
          %s2652 = smul.addr %s17, 256
          %s2653 = smul.addr %s2652, 4
          %s2654 = scalar_lea.hbm %s3, %s2653
          %s2655 = sshll.u32 %s2646, 4
          %s2656 = int_to_ptr.vmem [resolvable:$true] %s2655
          %s2657 = sshll.u32 %s2654, 4
          %s2658 = int_to_ptr.hbm [resolvable:$true] %s2657
          %2663 = dma.vmem_to_hbm [thread:$0]  %s2656, 16384, %s2658, %s2643, 64, 64, 4
        $region36: #{tpu_custom_call.1} parent=31 // pred_fallthru
          _
      $region32: #{tpu_custom_call.1} parent=5 // pred_fallthru
        _
      %p2664 = scmp.le.s32.totalorder 2, %s12
      // Predicated region
      $region37: #{tpu_custom_call.1} parent=5 // pred_check
        %p2665 = pneg %p2664
      $region38: #{tpu_custom_call.1} parent=5 // pred_check_branch
        %2667 = sbr.rel (%p2665) target = $region40
      $region39: #{tpu_custom_call.1} parent=5 // pred_region
        %s2668 = ssub.s32 %s12, 2
        // Predicated region
        $region41: #{tpu_custom_call.1} parent=39 // pred_check
          %p2669 = pneg %p109
        $region42: #{tpu_custom_call.1} parent=39 // pred_check_branch
          %2671 = sbr.rel (%p2669) target = $region44
        $region43: #{tpu_custom_call.1} parent=39 // pred_region
          %s2672 = sand.u32 %s94, 1
          %s2673 = scalar_lea.sflag [#allocation3], %s2672
          %s2674 = sand.u32 %s94, 1
          %s2675 = smul.addr %s2674, 1024
          %s2676 = scalar_lea.vmem [#allocation2], %s2675
          %2678 = dma.done %s2673, 16384
        $region44: #{tpu_custom_call.1} parent=39 // pred_fallthru
          _
      $region40: #{tpu_custom_call.1} parent=5 // pred_fallthru
        _
    $region6: #{tpu_custom_call.1} parent=1 // loop_footer
      %s16 = sadd.s32 1, %s12
    $region7: #{tpu_custom_call.1} parent=1 // loop_footer_branch
      %11 = sbr.rel target = $region3
    $region8: #{tpu_custom_call.1} parent=1 // loop_exit
      _
    %2679 = vsyncpa [#allocation3], 1
    %s2680 = scalar_lea.sflag [#allocation3], 1
    %2681 = vsyncpa %s2680, 1

</llo_original>
